<compile_context>
chip_gen: v7x
topology: tpu7x:2x2x1
jax: 0.10.0
libtpu: 0.0.40
codegen_flags: <defaults>
</compile_context>

<pallas_src>
import jax
import jax.numpy as jnp
from jax.experimental import pallas as pl
from jax.experimental.pallas import tpu as pltpu


# ---------------------------------------------------------------------------
# Depthwise conv kernel (NHWC): one (batch, channel-tile) plane per grid step.
# ---------------------------------------------------------------------------
def _dwconv_kernel(x_ref, w_ref, b_ref, o_ref):
    # x_ref: (Hp, Wp, Ct) padded input plane
    # w_ref: (KH, KW, Ct) per-channel taps, b_ref: (1, 1, Ct)
    # o_ref: (H, W, Ct)
    H, W, _ = o_ref.shape
    KH, KW, _ = w_ref.shape
    acc = jnp.zeros(o_ref.shape, jnp.float32)
    for i in range(KH):
        for j in range(KW):
            tap = w_ref[i:i + 1, j:j + 1, :].astype(jnp.float32)      # (1, 1, Ct)
            acc = acc + tap * x_ref[i:i + H, j:j + W, :].astype(jnp.float32)
    o_ref[...] = (acc + b_ref[...].astype(jnp.float32)).astype(o_ref.dtype)


def depthwise_conv2d_nhwc(x_nhwc, w_khwc, bias, pad_h, pad_w):
    """Depthwise conv2d, NHWC activations, weight layout (KH, KW, C)."""
    N, H, W, C = x_nhwc.shape
    KH, KW, _ = w_khwc.shape
    x_pad = jnp.pad(x_nhwc, ((0, 0), (pad_h, pad_h), (pad_w, pad_w), (0, 0)))
    Hp, Wp = H + 2 * pad_h, W + 2 * pad_w

    ct = C if C <= 128 else 128                 # channel tile on the lane axis
    n_ct = pl.cdiv(C, ct)
    b3 = bias.reshape(1, 1, C).astype(x_nhwc.dtype)

    return pl.pallas_call(
        _dwconv_kernel,
        out_shape=jax.ShapeDtypeStruct((N, H, W, C), x_nhwc.dtype),
        grid_spec=pltpu.PrefetchScalarGridSpec(
            num_scalar_prefetch=0,
            grid=(N, n_ct),
            in_specs=[
                pl.BlockSpec((None, Hp, Wp, ct), lambda n, c: (n, 0, 0, c)),
                pl.BlockSpec((KH, KW, ct), lambda n, c: (0, 0, c)),
                pl.BlockSpec((1, 1, ct), lambda n, c: (0, 0, c)),
            ],
            out_specs=pl.BlockSpec((None, H, W, ct), lambda n, c: (n, 0, 0, c)),
        ),
        compiler_params=pltpu.CompilerParams(
            dimension_semantics=("parallel", "parallel"),
            vmem_limit_bytes=32 * 1024 * 1024,
        ),
    )(x_pad, w_khwc.astype(x_nhwc.dtype), b3)


# ---------------------------------------------------------------------------
# Fused dense 3x3 conv + folded BatchNorm (affine) + SiLU kernel (NHWC).
# ---------------------------------------------------------------------------
def _conv_bn_silu_kernel(x_ref, w_ref, scale_ref, shift_ref, o_ref):
    # x_ref: (Hp, Wp, Cin) padded input
    # w_ref: (KH, KW, Cin, Ct_out); scale_ref/shift_ref: (1, Ct_out)
    # o_ref: (H*W, Ct_out)  -- spatial flattened so the store is a 2D slab
    KH, KW, Cin, Co = w_ref.shape
    Hp, Wp, _ = x_ref.shape
    H, W = Hp - (KH - 1), Wp - (KW - 1)

    acc = jnp.zeros((H * W, Co), jnp.float32)
    for i in range(KH):
        for j in range(KW):
            patch = x_ref[i:i + H, j:j + W, :].astype(jnp.float32)
            acc = acc + jnp.dot(patch.reshape(H * W, Cin),
                                w_ref[i, j].astype(jnp.float32),
                                preferred_element_type=jnp.float32)
    y = acc * scale_ref[...] + shift_ref[...]
    o_ref[...] = (y * (1.0 / (1.0 + jnp.exp(-y)))).astype(o_ref.dtype)  # SiLU


def conv_bn_silu_nhwc(x_nhwc, w_khwio, bn_scale, bn_shift, pad):
    """Dense conv (stride 1, no bias) + folded BN + SiLU. Weight (KH,KW,Cin,Cout)."""
    N, H, W, Cin = x_nhwc.shape
    KH, KW, _, Cout = w_khwio.shape
    x_pad = jnp.pad(x_nhwc, ((0, 0), (pad, pad), (pad, pad), (0, 0)))
    Hp, Wp = H + 2 * pad, W + 2 * pad

    ct = Cout if Cout <= 128 else 128           # output-channel tile (lane axis)
    n_ct = pl.cdiv(Cout, ct)
    scale2 = bn_scale.reshape(1, Cout).astype(jnp.float32)
    shift2 = bn_shift.reshape(1, Cout).astype(jnp.float32)

    out_flat = pl.pallas_call(
        _conv_bn_silu_kernel,
        out_shape=jax.ShapeDtypeStruct((N, H * W, Cout), x_nhwc.dtype),
        grid_spec=pltpu.PrefetchScalarGridSpec(
            num_scalar_prefetch=0,
            grid=(N, n_ct),
            in_specs=[
                pl.BlockSpec((None, Hp, Wp, Cin), lambda n, j: (n, 0, 0, 0)),
                pl.BlockSpec((KH, KW, Cin, ct), lambda n, j: (0, 0, 0, j)),
                pl.BlockSpec((1, ct), lambda n, j: (0, j)),
                pl.BlockSpec((1, ct), lambda n, j: (0, j)),
            ],
            out_specs=pl.BlockSpec((None, H * W, ct), lambda n, j: (n, 0, j)),
        ),
        compiler_params=pltpu.CompilerParams(
            dimension_semantics=("parallel", "parallel"),
            vmem_limit_bytes=32 * 1024 * 1024,
        ),
    )(x_pad, w_khwio.astype(x_nhwc.dtype), scale2, shift2)
    return out_flat.reshape(N, H, W, Cout)


# ---------------------------------------------------------------------------
# InceptionDWConv2d forward (NCHW in / NCHW out, like PyTorch)
# ---------------------------------------------------------------------------
def inception_dwconv2d_forward(x_nchw, params):
    N, C, H, W = x_nchw.shape
    gc = params["gc"]
    c_id = C - 3 * gc
    sk = params["square_kernel_size"]
    bk = params["band_kernel_size"]

    x = jnp.transpose(x_nchw, (0, 2, 3, 1))               # NHWC (channels -> lanes)

    x_id = x[..., :c_id]
    x_hw = x[..., c_id:c_id + gc]
    x_w = x[..., c_id + gc:c_id + 2 * gc]
    x_h = x[..., c_id + 2 * gc:]

    y_hw = depthwise_conv2d_nhwc(x_hw, params["dw_hw_w"], params["dw_hw_b"],
                                 sk // 2, sk // 2)
    y_w = depthwise_conv2d_nhwc(x_w, params["dw_w_w"], params["dw_w_b"],
                                0, bk // 2)
    y_h = depthwise_conv2d_nhwc(x_h, params["dw_h_w"], params["dw_h_b"],
                                bk // 2, 0)

    x_cat = jnp.concatenate([x_id, y_hw, y_w, y_h], axis=-1)

    # Fold eval-mode BatchNorm into a per-channel affine; fused with SiLU in-kernel.
    eps = params["bn_eps"]
    scale = params["bn_gamma"] / jnp.sqrt(params["bn_var"] + eps)
    shift = params["bn_beta"] - params["bn_mean"] * scale

    y = conv_bn_silu_nhwc(x_cat, params["conv_w"], scale, shift, pad=sk // 2)
    return jnp.transpose(y, (0, 3, 1, 2))                 # back to NCHW


# ---------------------------------------------------------------------------
# Parameters (kernel-native layouts) + pure-JAX reference for validation
# ---------------------------------------------------------------------------
def init_params(key, in_channels, out_channels, square_kernel_size=3,
                band_kernel_size=11, branch_ratio=0.125, dtype=jnp.float32):
    gc = int(in_channels * branch_ratio)
    ks = jax.random.split(key, 8)

    def w(k, shape, s=0.1):
        return (s * jax.random.normal(k, shape)).astype(dtype)

    return dict(
        gc=gc,
        square_kernel_size=square_kernel_size,
        band_kernel_size=band_kernel_size,
        dw_hw_w=w(ks[0], (square_kernel_size, square_kernel_size, gc)),
        dw_hw_b=w(ks[1], (gc,)),
        dw_w_w=w(ks[2], (1, band_kernel_size, gc)),
        dw_w_b=w(ks[3], (gc,)),
        dw_h_w=w(ks[4], (band_kernel_size, 1, gc)),
        dw_h_b=w(ks[5], (gc,)),
        conv_w=w(ks[6], (square_kernel_size, square_kernel_size,
                         in_channels, out_channels)),
        bn_gamma=(1.0 + 0.1 * jax.random.normal(ks[7], (out_channels,))).astype(dtype),
        bn_beta=jnp.full((out_channels,), 0.05, dtype),
        bn_mean=jnp.full((out_channels,), 0.02, dtype),
        bn_var=jnp.ones((out_channels,), dtype),
        bn_eps=1e-5,
    )


def reference_forward(x_nchw, params):
    gc = params["gc"]
    C = x_nchw.shape[1]
    c_id = C - 3 * gc
    sk = params["square_kernel_size"]
    bk = params["band_kernel_size"]

    x_id = x_nchw[:, :c_id]
    x_hw = x_nchw[:, c_id:c_id + gc]
    x_w = x_nchw[:, c_id + gc:c_id + 2 * gc]
    x_h = x_nchw[:, c_id + 2 * gc:]

    def dw(x, w_khc, b, pad):
        w_oihw = jnp.transpose(w_khc, (2, 0, 1))[:, None]
        y = jax.lax.conv_general_dilated(
            x, w_oihw, window_strides=(1, 1), padding=pad,
            dimension_numbers=("NCHW", "OIHW", "NCHW"),
            feature_group_count=gc)
        return y + b[None, :, None, None]

    y_hw = dw(x_hw, params["dw_hw_w"], params["dw_hw_b"],
              [(sk // 2, sk // 2), (sk // 2, sk // 2)])
    y_w = dw(x_w, params["dw_w_w"], params["dw_w_b"],
             [(0, 0), (bk // 2, bk // 2)])
    y_h = dw(x_h, params["dw_h_w"], params["dw_h_b"],
             [(bk // 2, bk // 2), (0, 0)])

    x_cat = jnp.concatenate([x_id, y_hw, y_w, y_h], axis=1)
    w_oihw = jnp.transpose(params["conv_w"], (3, 2, 0, 1))
    y = jax.lax.conv_general_dilated(
        x_cat, w_oihw, window_strides=(1, 1),
        padding=[(sk // 2, sk // 2), (sk // 2, sk // 2)],
        dimension_numbers=("NCHW", "OIHW", "NCHW"))
    eps = params["bn_eps"]
    scale = params["bn_gamma"] / jnp.sqrt(params["bn_var"] + eps)
    shift = params["bn_beta"] - params["bn_mean"] * scale
    y = y * scale[None, :, None, None] + shift[None, :, None, None]
    return y * jax.nn.sigmoid(y)


if __name__ == "__main__":
    key = jax.random.PRNGKey(0)
    kx, kp = jax.random.split(key)

    N, Cin, H, W = 2, 16, 16, 16     # gc = 2, split = (10, 2, 2, 2)
    Cout = 16
    x = jax.random.normal(kx, (N, Cin, H, W), dtype=jnp.float32)
    params = init_params(kp, Cin, Cout)

    out = inception_dwconv2d_forward(x, params)
    out = jax.block_until_ready(out)
    assert out.shape == (N, Cout, H, W) and out.dtype == x.dtype

    ref = reference_forward(x, params)
    err = float(jnp.max(jnp.abs(out - ref)))
    assert err < 2e-2, f"max abs error {err}"

    print("KERNEL_OK")
</pallas_src>

<mosaic_0001>
module attributes {stable_mosaic.version = 11 : i64} {
  func.func @_dwconv_kernel(%arg0: i32, %arg1: i32, %arg2: memref<1x18x18x2xf32, #tpu.memory_space<vmem>>, %arg3: memref<3x3x2xf32, #tpu.memory_space<vmem>>, %arg4: memref<1x1x2xf32, #tpu.memory_space<vmem>>, %arg5: memref<1x16x16x2xf32, #tpu.memory_space<vmem>>) attributes {dimension_semantics = [#tpu.dimension_semantics<parallel>, #tpu.dimension_semantics<parallel>], iteration_bounds = array<i64: 2, 1>, scalar_prefetch = 0 : i64, scratch_operands = 0 : i64, tpu.core_type = #tpu.core_type<tc>, window_params = [{transform_indices = @transform_0, window_bounds = array<i64: 1, 18, 18, 2>}, {transform_indices = @transform_1, window_bounds = array<i64: 3, 3, 2>}, {transform_indices = @transform_2, window_bounds = array<i64: 1, 1, 2>}, {transform_indices = @transform_3, window_bounds = array<i64: 1, 16, 16, 2>}]} {
    %cst = arith.constant 0.000000e+00 : f32
    %0 = vector.broadcast %cst : f32 to vector<16x16x2xf32>
    %c0 = arith.constant 0 : index
    %c0_0 = arith.constant 0 : index
    %c0_1 = arith.constant 0 : index
    %1 = vector.load %arg3[%c0, %c0_0, %c0_1] : memref<3x3x2xf32, #tpu.memory_space<vmem>>, vector<1x1x2xf32>
    %c0_2 = arith.constant 0 : index
    %c0_3 = arith.constant 0 : index
    %c0_4 = arith.constant 0 : index
    %c0_5 = arith.constant 0 : index
    %2 = vector.load %arg2[%c0_2, %c0_3, %c0_4, %c0_5] : memref<1x18x18x2xf32, #tpu.memory_space<vmem>>, vector<1x16x16x2xf32>
    %3 = vector.shape_cast %2 : vector<1x16x16x2xf32> to vector<16x16x2xf32>
    %4 = vector.broadcast %1 : vector<1x1x2xf32> to vector<16x16x2xf32>
    %5 = arith.mulf %4, %3 : vector<16x16x2xf32>
    %6 = arith.addf %0, %5 : vector<16x16x2xf32>
    %c0_6 = arith.constant 0 : index
    %c1 = arith.constant 1 : index
    %c0_7 = arith.constant 0 : index
    %7 = vector.load %arg3[%c0_6, %c1, %c0_7] : memref<3x3x2xf32, #tpu.memory_space<vmem>>, vector<1x1x2xf32>
    %c0_8 = arith.constant 0 : index
    %c0_9 = arith.constant 0 : index
    %c1_10 = arith.constant 1 : index
    %c0_11 = arith.constant 0 : index
    %8 = vector.load %arg2[%c0_8, %c0_9, %c1_10, %c0_11] : memref<1x18x18x2xf32, #tpu.memory_space<vmem>>, vector<1x16x16x2xf32>
    %9 = vector.shape_cast %8 : vector<1x16x16x2xf32> to vector<16x16x2xf32>
    %10 = vector.broadcast %7 : vector<1x1x2xf32> to vector<16x16x2xf32>
    %11 = arith.mulf %10, %9 : vector<16x16x2xf32>
    %12 = arith.addf %6, %11 : vector<16x16x2xf32>
    %c0_12 = arith.constant 0 : index
    %c2 = arith.constant 2 : index
    %c0_13 = arith.constant 0 : index
    %13 = vector.load %arg3[%c0_12, %c2, %c0_13] : memref<3x3x2xf32, #tpu.memory_space<vmem>>, vector<1x1x2xf32>
    %c0_14 = arith.constant 0 : index
    %c0_15 = arith.constant 0 : index
    %c2_16 = arith.constant 2 : index
    %c0_17 = arith.constant 0 : index
    %14 = vector.load %arg2[%c0_14, %c0_15, %c2_16, %c0_17] : memref<1x18x18x2xf32, #tpu.memory_space<vmem>>, vector<1x16x16x2xf32>
    %15 = vector.shape_cast %14 : vector<1x16x16x2xf32> to vector<16x16x2xf32>
    %16 = vector.broadcast %13 : vector<1x1x2xf32> to vector<16x16x2xf32>
    %17 = arith.mulf %16, %15 : vector<16x16x2xf32>
    %18 = arith.addf %12, %17 : vector<16x16x2xf32>
    %c1_18 = arith.constant 1 : index
    %c0_19 = arith.constant 0 : index
    %c0_20 = arith.constant 0 : index
    %19 = vector.load %arg3[%c1_18, %c0_19, %c0_20] : memref<3x3x2xf32, #tpu.memory_space<vmem>>, vector<1x1x2xf32>
    %c0_21 = arith.constant 0 : index
    %c1_22 = arith.constant 1 : index
    %c0_23 = arith.constant 0 : index
    %c0_24 = arith.constant 0 : index
    %20 = vector.load %arg2[%c0_21, %c1_22, %c0_23, %c0_24] : memref<1x18x18x2xf32, #tpu.memory_space<vmem>>, vector<1x16x16x2xf32>
    %21 = vector.shape_cast %20 : vector<1x16x16x2xf32> to vector<16x16x2xf32>
    %22 = vector.broadcast %19 : vector<1x1x2xf32> to vector<16x16x2xf32>
    %23 = arith.mulf %22, %21 : vector<16x16x2xf32>
    %24 = arith.addf %18, %23 : vector<16x16x2xf32>
    %c1_25 = arith.constant 1 : index
    %c1_26 = arith.constant 1 : index
    %c0_27 = arith.constant 0 : index
    %25 = vector.load %arg3[%c1_25, %c1_26, %c0_27] : memref<3x3x2xf32, #tpu.memory_space<vmem>>, vector<1x1x2xf32>
    %c0_28 = arith.constant 0 : index
    %c1_29 = arith.constant 1 : index
    %c1_30 = arith.constant 1 : index
    %c0_31 = arith.constant 0 : index
    %26 = vector.load %arg2[%c0_28, %c1_29, %c1_30, %c0_31] : memref<1x18x18x2xf32, #tpu.memory_space<vmem>>, vector<1x16x16x2xf32>
    %27 = vector.shape_cast %26 : vector<1x16x16x2xf32> to vector<16x16x2xf32>
    %28 = vector.broadcast %25 : vector<1x1x2xf32> to vector<16x16x2xf32>
    %29 = arith.mulf %28, %27 : vector<16x16x2xf32>
    %30 = arith.addf %24, %29 : vector<16x16x2xf32>
    %c1_32 = arith.constant 1 : index
    %c2_33 = arith.constant 2 : index
    %c0_34 = arith.constant 0 : index
    %31 = vector.load %arg3[%c1_32, %c2_33, %c0_34] : memref<3x3x2xf32, #tpu.memory_space<vmem>>, vector<1x1x2xf32>
    %c0_35 = arith.constant 0 : index
    %c1_36 = arith.constant 1 : index
    %c2_37 = arith.constant 2 : index
    %c0_38 = arith.constant 0 : index
    %32 = vector.load %arg2[%c0_35, %c1_36, %c2_37, %c0_38] : memref<1x18x18x2xf32, #tpu.memory_space<vmem>>, vector<1x16x16x2xf32>
    %33 = vector.shape_cast %32 : vector<1x16x16x2xf32> to vector<16x16x2xf32>
    %34 = vector.broadcast %31 : vector<1x1x2xf32> to vector<16x16x2xf32>
    %35 = arith.mulf %34, %33 : vector<16x16x2xf32>
    %36 = arith.addf %30, %35 : vector<16x16x2xf32>
    %c2_39 = arith.constant 2 : index
    %c0_40 = arith.constant 0 : index
    %c0_41 = arith.constant 0 : index
    %37 = vector.load %arg3[%c2_39, %c0_40, %c0_41] : memref<3x3x2xf32, #tpu.memory_space<vmem>>, vector<1x1x2xf32>
    %c0_42 = arith.constant 0 : index
    %c2_43 = arith.constant 2 : index
    %c0_44 = arith.constant 0 : index
    %c0_45 = arith.constant 0 : index
    %38 = vector.load %arg2[%c0_42, %c2_43, %c0_44, %c0_45] : memref<1x18x18x2xf32, #tpu.memory_space<vmem>>, vector<1x16x16x2xf32>
    %39 = vector.shape_cast %38 : vector<1x16x16x2xf32> to vector<16x16x2xf32>
    %40 = vector.broadcast %37 : vector<1x1x2xf32> to vector<16x16x2xf32>
    %41 = arith.mulf %40, %39 : vector<16x16x2xf32>
    %42 = arith.addf %36, %41 : vector<16x16x2xf32>
    %c2_46 = arith.constant 2 : index
    %c1_47 = arith.constant 1 : index
    %c0_48 = arith.constant 0 : index
    %43 = vector.load %arg3[%c2_46, %c1_47, %c0_48] : memref<3x3x2xf32, #tpu.memory_space<vmem>>, vector<1x1x2xf32>
    %c0_49 = arith.constant 0 : index
    %c2_50 = arith.constant 2 : index
    %c1_51 = arith.constant 1 : index
    %c0_52 = arith.constant 0 : index
    %44 = vector.load %arg2[%c0_49, %c2_50, %c1_51, %c0_52] : memref<1x18x18x2xf32, #tpu.memory_space<vmem>>, vector<1x16x16x2xf32>
    %45 = vector.shape_cast %44 : vector<1x16x16x2xf32> to vector<16x16x2xf32>
    %46 = vector.broadcast %43 : vector<1x1x2xf32> to vector<16x16x2xf32>
    %47 = arith.mulf %46, %45 : vector<16x16x2xf32>
    %48 = arith.addf %42, %47 : vector<16x16x2xf32>
    %c2_53 = arith.constant 2 : index
    %c2_54 = arith.constant 2 : index
    %c0_55 = arith.constant 0 : index
    %49 = vector.load %arg3[%c2_53, %c2_54, %c0_55] : memref<3x3x2xf32, #tpu.memory_space<vmem>>, vector<1x1x2xf32>
    %c0_56 = arith.constant 0 : index
    %c2_57 = arith.constant 2 : index
    %c2_58 = arith.constant 2 : index
    %c0_59 = arith.constant 0 : index
    %50 = vector.load %arg2[%c0_56, %c2_57, %c2_58, %c0_59] : memref<1x18x18x2xf32, #tpu.memory_space<vmem>>, vector<1x16x16x2xf32>
    %51 = vector.shape_cast %50 : vector<1x16x16x2xf32> to vector<16x16x2xf32>
    %52 = vector.broadcast %49 : vector<1x1x2xf32> to vector<16x16x2xf32>
    %53 = arith.mulf %52, %51 : vector<16x16x2xf32>
    %54 = arith.addf %48, %53 : vector<16x16x2xf32>
    %c0_60 = arith.constant 0 : index
    %c0_61 = arith.constant 0 : index
    %c0_62 = arith.constant 0 : index
    %55 = vector.load %arg4[%c0_60, %c0_61, %c0_62] : memref<1x1x2xf32, #tpu.memory_space<vmem>>, vector<1x1x2xf32>
    %56 = vector.broadcast %55 : vector<1x1x2xf32> to vector<16x16x2xf32>
    %57 = arith.addf %54, %56 : vector<16x16x2xf32>
    %c0_63 = arith.constant 0 : index
    %c0_64 = arith.constant 0 : index
    %c0_65 = arith.constant 0 : index
    %c0_66 = arith.constant 0 : index
    %58 = vector.load %arg5[%c0_63, %c0_64, %c0_65, %c0_66] : memref<1x16x16x2xf32, #tpu.memory_space<vmem>>, vector<1x16x16x2xf32>
    %59 = vector.shape_cast %58 : vector<1x16x16x2xf32> to vector<16x16x2xf32>
    %60 = vector.shape_cast %57 : vector<16x16x2xf32> to vector<1x16x16x2xf32>
    tpu.vector_store %arg5[%c0_63, %c0_64, %c0_65, %c0_66], %60 {strides = array<i32>} : memref<1x16x16x2xf32, #tpu.memory_space<vmem>>, vector<1x16x16x2xf32>,
    return
  }
  func.func @transform_0(%arg0: i32, %arg1: i32) -> (i32, i32, i32, i32) {
    %c0_i32 = arith.constant 0 : i32
    %c0_i32_0 = arith.constant 0 : i32
    %c0_i32_1 = arith.constant 0 : i32
    return %arg0, %c0_i32, %c0_i32_0, %arg1 : i32, i32, i32, i32
  }
  func.func @transform_1(%arg0: i32, %arg1: i32) -> (i32, i32, i32) {
    %c0_i32 = arith.constant 0 : i32
    %c0_i32_0 = arith.constant 0 : i32
    %c0_i32_1 = arith.constant 0 : i32
    return %c0_i32, %c0_i32_0, %arg1 : i32, i32, i32
  }
  func.func @transform_2(%arg0: i32, %arg1: i32) -> (i32, i32, i32) {
    %c0_i32 = arith.constant 0 : i32
    %c0_i32_0 = arith.constant 0 : i32
    %c0_i32_1 = arith.constant 0 : i32
    return %c0_i32, %c0_i32_0, %arg1 : i32, i32, i32
  }
  func.func @transform_3(%arg0: i32, %arg1: i32) -> (i32, i32, i32, i32) {
    %c0_i32 = arith.constant 0 : i32
    %c0_i32_0 = arith.constant 0 : i32
    %c0_i32_1 = arith.constant 0 : i32
    return %arg0, %c0_i32, %c0_i32_0, %arg1 : i32, i32, i32, i32
  }
}

</mosaic_0001>

<llo_original>
// kernel: tpu_custom_call.1
$region0: #{tpu_custom_call.1}
  #allocation0 [shape = 'u32[]', space=smem, size = 0x4, offset = 0x4, fixed_abs, tag = 'smem constant byte address 0x4 - core index']
  #allocation1 [shape = 'u32[144,128]{1,0:T(1,128)}', space=vmem, size = 0x12000, scoped, tag = 'internal scratch']
  %s0 = inlined_call_operand.vmem [shape: f32[2,18,18,2], index: 0, kind: input, shape index: {}]
  %s1 = inlined_call_operand.vmem [shape: f32[3,3,2], index: 1, kind: input, shape index: {}]
  %s2 = inlined_call_operand.vmem [shape: f32[1,1,2], index: 2, kind: input, shape index: {}]
  %s3 = inlined_call_operand.vmem [shape: f32[2,16,16,2], index: 3, kind: output, shape index: {}]
  %s4 = sld [smem:[#allocation0]]
  $region45: #{tpu_custom_call.1} parent=0
    _
  %s6 = ssub.s32 1, %s4
  %s7 = scalar_select 0, %s6, %s4
  loop: start=0, step=1, limit=4
  $region2: #{tpu_custom_call.1} parent=0 // loop_pre_header
    _
  $region3: #{tpu_custom_call.1} parent=0 // loop_header
    %s9 = sphi 0, %s13
    %p10 = scmp.ge.s32.totalorder %s9, 4
    %s16 = sphi 0, %s28
    %s17 = sphi 0, %s24
    %s18 = sphi 0, %s16
    %s19 = sphi 0, %s17
    %s20 = sphi 0, %s18
    %s21 = sphi 0, %s19
    %s33 = sphi 0, %s35
    %s36 = sphi 0, %s33
    %s37 = sphi 0, %s36
    %s53 = sphi 0, %s37
    %s59 = sphi 0, %s61
    %s62 = sphi 0, %s59
    %s63 = sphi 0, %s62
    %s79 = sphi 0, %s63
    %s85 = sphi 0, %s87
    %s88 = sphi 0, %s85
    %s89 = sphi 0, %s88
    %s105 = sphi 0, %s89
    %s113 = sphi 0, %s115
    %s116 = sphi 0, %s113
    %s117 = sphi 0, %s116
    %s133 = sphi 0, %s117
  $region4: #{tpu_custom_call.1} parent=0 // loop_header_branch
    %12 = sbr.rel (%p10) target = $region8
  $region5: #{tpu_custom_call.1} parent=0 // loop_body
    %s14 = ssub.s32 %s9, 1
    %s15 = ssub.s32 %s9, 2
    %s22 = sadd.s32 1, %s17
    %p23 = scmp.ge.s32.totalorder %s22, 1
    %s24 = scalar_select %p23, 0, %s22
    %s25 = sadd.s32 1, %s16
    %s26 = scalar_select %p23, %s25, %s16
    %p27 = scmp.ge.s32.totalorder %s26, 2
    %s28 = scalar_select %p27, 0, %s26
    %s29 = ssub.s32 %s16, %s28
    %s30 = ssub.s32 %s17, %s24
    %s31 = sor.u32 %s29, %s30
    %p32 = scmp.eq.s32.totalorder %s31, 0
    %s34 = sadd.s32 %s33, 1
    %s35 = scalar_select %p32, %s33, %s34
    %p38 = pneg %p32
    %p39 = scmp.eq.s32.totalorder %s9, 1
    %p40 = por %p38, %p39
    %p41 = scmp.ne.s32.totalorder %s33, %s36
    %p42 = scmp.eq.s32.totalorder %s9, 0
    %p43 = por %p41, %p42
    %p44 = scmp.ne.s32.totalorder %s33, %s36
    %p45 = scmp.eq.s32.totalorder %s14, 1
    %p46 = por %p44, %p45
    %p47 = scmp.ne.s32.totalorder %s36, %s37
    %p48 = scmp.eq.s32.totalorder %s14, 0
    %p49 = por %p47, %p48
    %p50 = scmp.ne.s32.totalorder %s36, %s37
    %p51 = scmp.eq.s32.totalorder %s15, 1
    %p52 = por %p50, %p51
    %p54 = scmp.ne.s32.totalorder %s37, %s53
    %p55 = scmp.eq.s32.totalorder %s15, 0
    %p56 = por %p54, %p55
    %s57 = ssub.s32 %s17, %s24
    %p58 = scmp.eq.s32.totalorder %s57, 0
    %s60 = sadd.s32 %s59, 1
    %s61 = scalar_select %p58, %s59, %s60
    %p64 = pneg %p58
    %p65 = scmp.eq.s32.totalorder %s9, 1
    %p66 = por %p64, %p65
    %p67 = scmp.ne.s32.totalorder %s59, %s62
    %p68 = scmp.eq.s32.totalorder %s9, 0
    %p69 = por %p67, %p68
    %p70 = scmp.ne.s32.totalorder %s59, %s62
    %p71 = scmp.eq.s32.totalorder %s14, 1
    %p72 = por %p70, %p71
    %p73 = scmp.ne.s32.totalorder %s62, %s63
    %p74 = scmp.eq.s32.totalorder %s14, 0
    %p75 = por %p73, %p74
    %p76 = scmp.ne.s32.totalorder %s62, %s63
    %p77 = scmp.eq.s32.totalorder %s15, 1
    %p78 = por %p76, %p77
    %p80 = scmp.ne.s32.totalorder %s63, %s79
    %p81 = scmp.eq.s32.totalorder %s15, 0
    %p82 = por %p80, %p81
    %s83 = ssub.s32 %s17, %s24
    %p84 = scmp.eq.s32.totalorder %s83, 0
    %s86 = sadd.s32 %s85, 1
    %s87 = scalar_select %p84, %s85, %s86
    %p90 = pneg %p84
    %p91 = scmp.eq.s32.totalorder %s9, 1
    %p92 = por %p90, %p91
    %p93 = scmp.ne.s32.totalorder %s85, %s88
    %p94 = scmp.eq.s32.totalorder %s9, 0
    %p95 = por %p93, %p94
    %p96 = scmp.ne.s32.totalorder %s85, %s88
    %p97 = scmp.eq.s32.totalorder %s14, 1
    %p98 = por %p96, %p97
    %p99 = scmp.ne.s32.totalorder %s88, %s89
    %p100 = scmp.eq.s32.totalorder %s14, 0
    %p101 = por %p99, %p100
    %p102 = scmp.ne.s32.totalorder %s88, %s89
    %p103 = scmp.eq.s32.totalorder %s15, 1
    %p104 = por %p102, %p103
    %p106 = scmp.ne.s32.totalorder %s89, %s105
    %p107 = scmp.eq.s32.totalorder %s15, 0
    %p108 = por %p106, %p107
    %s109 = ssub.s32 %s16, %s28
    %s110 = ssub.s32 %s17, %s24
    %s111 = sor.u32 %s109, %s110
    %p112 = scmp.eq.s32.totalorder %s111, 0
    %s114 = sadd.s32 %s113, 1
    %s115 = scalar_select %p112, %s113, %s114
    %p118 = pneg %p112
    %p119 = scmp.eq.s32.totalorder %s9, 1
    %p120 = por %p118, %p119
    %p121 = scmp.ne.s32.totalorder %s113, %s116
    %p122 = scmp.eq.s32.totalorder %s9, 0
    %p123 = por %p121, %p122
    %p124 = scmp.ne.s32.totalorder %s113, %s116
    %p125 = scmp.eq.s32.totalorder %s14, 1
    %p126 = por %p124, %p125
    %p127 = scmp.ne.s32.totalorder %s116, %s117
    %p128 = scmp.eq.s32.totalorder %s14, 0
    %p129 = por %p127, %p128
    %p130 = scmp.ne.s32.totalorder %s116, %s117
    %p131 = scmp.eq.s32.totalorder %s15, 1
    %p132 = por %p130, %p131
    %p134 = scmp.ne.s32.totalorder %s117, %s133
    %p135 = scmp.eq.s32.totalorder %s15, 0
    %p136 = por %p134, %p135
    %p137 = scmp.le.s32.totalorder 1, %s9
    %p138 = scmp.lt.s32.totalorder %s9, 3
    %p139 = pnand %p137, %p138
    %p140 = pneg %p139
    // Predicated region
    $region9: #{tpu_custom_call.1} parent=5 // pred_check
      _
    $region10: #{tpu_custom_call.1} parent=5 // pred_check_branch
      %142 = sbr.rel (%p139) target = $region12
    $region11: #{tpu_custom_call.1} parent=5 // pred_region
      %s143 = ssub.s32 %s9, 1
      // Predicated region
      $region13: #{tpu_custom_call.1} parent=11 // pred_check
        %p144 = pneg %p75
      $region14: #{tpu_custom_call.1} parent=11 // pred_check_branch
        %146 = sbr.rel (%p144) target = $region16
      $region15: #{tpu_custom_call.1} parent=11 // pred_region
        %p147 = scmp.lt.s32.totalorder %s19, 0
        %s148 = scalar_select %p147, %s19, 0
        %s149 = smul.addr %s148, 4
        %s150 = scalar_lea.vmem %s1, %s149
      $region16: #{tpu_custom_call.1} parent=11 // pred_fallthru
        _
      // Predicated region
      $region17: #{tpu_custom_call.1} parent=11 // pred_check
        %p151 = pneg %p101
      $region18: #{tpu_custom_call.1} parent=11 // pred_check_branch
        %153 = sbr.rel (%p151) target = $region20
      $region19: #{tpu_custom_call.1} parent=11 // pred_region
        %p154 = scmp.lt.s32.totalorder %s19, 0
        %s155 = scalar_select %p154, %s19, 0
        %s156 = scalar_lea.vmem %s2, %s155
      $region20: #{tpu_custom_call.1} parent=11 // pred_fallthru
        _
    $region12: #{tpu_custom_call.1} parent=5 // pred_fallthru
      _
    %p157 = scmp.lt.s32.totalorder %s9, 2
    // Predicated region
    $region21: #{tpu_custom_call.1} parent=5 // pred_check
      %p158 = pneg %p157
    $region22: #{tpu_custom_call.1} parent=5 // pred_check_branch
      %160 = sbr.rel (%p158) target = $region24
    $region23: #{tpu_custom_call.1} parent=5 // pred_region
      // Predicated region
      $region25: #{tpu_custom_call.1} parent=23 // pred_check
        %p161 = pneg %p43
      $region26: #{tpu_custom_call.1} parent=23 // pred_check_branch
        %163 = sbr.rel (%p161) target = $region28
      $region27: #{tpu_custom_call.1} parent=23 // pred_region
        %p164 = scmp.lt.s32.totalorder %s16, 1
        %s165 = scalar_select %p164, %s16, 1
        %p166 = scmp.lt.s32.totalorder %s17, 0
        %s167 = scalar_select %p166, %s17, 0
        %s168 = smul.addr %s165, 54
        %s169 = sadd.s32 %s167, %s168
        %s170 = smul.addr %s169, 8
        %s171 = scalar_lea.vmem %s0, %s170
      $region28: #{tpu_custom_call.1} parent=23 // pred_fallthru
        _
    $region24: #{tpu_custom_call.1} parent=5 // pred_fallthru
      _
    %p172 = scmp.le.s32.totalorder 1, %s9
    %p173 = scmp.lt.s32.totalorder %s9, 3
    %p174 = pnand %p172, %p173
    %p175 = pneg %p174
    // Predicated region
    $region29: #{tpu_custom_call.1} parent=5 // pred_check
      _
    $region30: #{tpu_custom_call.1} parent=5 // pred_check_branch
      %177 = sbr.rel (%p174) target = $region32
    $region31: #{tpu_custom_call.1} parent=5 // pred_region
      %s178 = ssub.s32 %s9, 1
      %p179 = scmp.lt.s32.totalorder %s18, 1
      %s180 = scalar_select %p179, %s18, 1
      %p181 = scmp.lt.s32.totalorder %s19, 0
      %s182 = scalar_select %p181, %s19, 0
      %s183 = smul.addr %s180, 54
      %s184 = sadd.s32 %s182, %s183
      %s185 = smul.addr %s184, 8
      %s186 = scalar_lea.vmem %s0, %s185
      %p187 = pneg %p49
      %p188 = pneg %p46
      %p189 = scmp.lt.s32.totalorder %s19, 0
      %s190 = scalar_select %p189, %s19, 0
      %s191 = smul.addr %s190, 4
      %s192 = scalar_lea.vmem %s1, %s191
      %p193 = pneg %p75
      %p194 = pneg %p72
      %p195 = scmp.lt.s32.totalorder %s19, 0
      %s196 = scalar_select %p195, %s19, 0
      %s197 = scalar_lea.vmem %s2, %s196
      %p198 = pneg %p101
      %p199 = pneg %p98
      %p200 = pneg %p129
      %p201 = pneg %p126
      %p202 = scmp.lt.s32.totalorder %s18, 1
      %s203 = scalar_select %p202, %s18, 1
      %p204 = scmp.lt.s32.totalorder %s19, 0
      %s205 = scalar_select %p204, %s19, 0
      %s206 = smul.addr %s203, 32
      %s207 = sadd.s32 %s205, %s206
      %s208 = smul.addr %s207, 8
      %s209 = scalar_lea.vmem %s3, %s208
      %p210 = scmp.lt.s32.totalorder %s18, 1
      %s211 = scalar_select %p210, %s18, 1
      %p212 = scmp.lt.s32.totalorder %s19, 0
      %s213 = scalar_select %p212, %s19, 0
      %s214 = smul.addr %s211, 54
      %s215 = sadd.s32 %s213, %s214
      %s216 = smul.addr %s215, 8
      %s217 = scalar_lea.vmem %s0, %s216
      %p218 = scmp.lt.s32.totalorder %s19, 0
      %s219 = scalar_select %p218, %s19, 0
      %s220 = smul.addr %s219, 4
      %s221 = scalar_lea.vmem %s1, %s220
      %p222 = scmp.lt.s32.totalorder %s19, 0
      %s223 = scalar_select %p222, %s19, 0
      %s224 = scalar_lea.vmem %s2, %s223
      %p225 = scmp.lt.s32.totalorder %s18, 1
      %s226 = scalar_select %p225, %s18, 1
      %p227 = scmp.lt.s32.totalorder %s19, 0
      %s228 = scalar_select %p227, %s19, 0
      %s229 = smul.addr %s226, 32
      %s230 = sadd.s32 %s228, %s229
      %s231 = smul.addr %s230, 8
      %s232 = scalar_lea.vmem %s3, %s231
      %v233 = vld [vmem:[%s221] sm:$0x1]
      %v234 = vld [vmem:[%s217] sm:$0xff]
      %v235 = vld [vmem:[%s217 + $0x8] sm:$0xff]
      %v236 = vld [vmem:[%s217 + $0x18] sm:$0xff]
      %v237 = vld [vmem:[%s217 + $0x20] sm:$0xff]
      %v238 = vld [vmem:[%s217 + $0x30] sm:$0xff]
      %v239 = vld [vmem:[%s217 + $0x38] sm:$0xff]
      %v240 = vld [vmem:[%s217 + $0x48] sm:$0xff]
      %v241 = vld [vmem:[%s217 + $0x50] sm:$0xff]
      %v242 = vld [vmem:[%s217 + $0x60] sm:$0xff]
      %v243 = vld [vmem:[%s217 + $0x68] sm:$0xff]
      %v244 = vld [vmem:[%s217 + $0x78] sm:$0xff]
      %v245 = vld [vmem:[%s217 + $0x80] sm:$0xff]
      %v246 = vld [vmem:[%s217 + $0x90] sm:$0xff]
      %v247 = vld [vmem:[%s217 + $0x98] sm:$0xff]
      %v248 = vld [vmem:[%s217 + $0xa8] sm:$0xff]
      %v249 = vld [vmem:[%s217 + $0xb0] sm:$0xff]
      %v250 = vld [vmem:[%s217 + $0xc0] sm:$0xff]
      %v251 = vld [vmem:[%s217 + $0xc8] sm:$0xff]
      %v252 = vld [vmem:[%s217 + $0xd8] sm:$0xff]
      %v253 = vld [vmem:[%s217 + $0xe0] sm:$0xff]
      %v254 = vld [vmem:[%s217 + $0xf0] sm:$0xff]
      %v255 = vld [vmem:[%s217 + $0xf8] sm:$0xff]
      %v256 = vld [vmem:[%s217 + $0x108] sm:$0xff]
      %v257 = vld [vmem:[%s217 + $0x110] sm:$0xff]
      %v258 = vld [vmem:[%s217 + $0x120] sm:$0xff]
      %v259 = vld [vmem:[%s217 + $0x128] sm:$0xff]
      %v260 = vld [vmem:[%s217 + $0x138] sm:$0xff]
      %v261 = vld [vmem:[%s217 + $0x140] sm:$0xff]
      %v262 = vld [vmem:[%s217 + $0x150] sm:$0xff]
      %v263 = vld [vmem:[%s217 + $0x158] sm:$0xff]
      %v264 = vld [vmem:[%s217 + $0x168] sm:$0xff]
      %v265 = vld [vmem:[%s217 + $0x170] sm:$0xff]
      %v266 = vlaneseq
      %v267 = vshrl.u32 %v266, 7
      %v268 = vsub.s32 0, %v267
      %v269 = vrot.slane %v233, %v268
      %v270 = vmul.f32 %v269, %v234
      %v271 = vmul.f32 %v269, %v235
      %v272 = vmul.f32 %v269, %v236
      %v273 = vmul.f32 %v269, %v237
      %v274 = vmul.f32 %v269, %v238
      %v275 = vmul.f32 %v269, %v239
      %v276 = vmul.f32 %v269, %v240
      %v277 = vmul.f32 %v269, %v241
      %v278 = vmul.f32 %v269, %v242
      %v279 = vmul.f32 %v269, %v243
      %v280 = vmul.f32 %v269, %v244
      %v281 = vmul.f32 %v269, %v245
      %v282 = vmul.f32 %v269, %v246
      %v283 = vmul.f32 %v269, %v247
      %v284 = vmul.f32 %v269, %v248
      %v285 = vmul.f32 %v269, %v249
      %v286 = vmul.f32 %v269, %v250
      %v287 = vmul.f32 %v269, %v251
      %v288 = vmul.f32 %v269, %v252
      %v289 = vmul.f32 %v269, %v253
      %v290 = vmul.f32 %v269, %v254
      %v291 = vmul.f32 %v269, %v255
      %v292 = vmul.f32 %v269, %v256
      %v293 = vmul.f32 %v269, %v257
      %v294 = vmul.f32 %v269, %v258
      %v295 = vmul.f32 %v269, %v259
      %v296 = vmul.f32 %v269, %v260
      %v297 = vmul.f32 %v269, %v261
      %v298 = vmul.f32 %v269, %v262
      %v299 = vmul.f32 %v269, %v263
      %v300 = vmul.f32 %v269, %v264
      %v301 = vmul.f32 %v269, %v265
      %v302 = vadd.f32 %v270, 0.0
      %v303 = vadd.f32 %v271, 0.0
      %v304 = vadd.f32 %v272, 0.0
      %v305 = vadd.f32 %v273, 0.0
      %v306 = vadd.f32 %v274, 0.0
      %v307 = vadd.f32 %v275, 0.0
      %v308 = vadd.f32 %v276, 0.0
      %v309 = vadd.f32 %v277, 0.0
      %v310 = vadd.f32 %v278, 0.0
      %v311 = vadd.f32 %v279, 0.0
      %v312 = vadd.f32 %v280, 0.0
      %v313 = vadd.f32 %v281, 0.0
      %v314 = vadd.f32 %v282, 0.0
      %v315 = vadd.f32 %v283, 0.0
      %v316 = vadd.f32 %v284, 0.0
      %v317 = vadd.f32 %v285, 0.0
      %v318 = vadd.f32 %v286, 0.0
      %v319 = vadd.f32 %v287, 0.0
      %v320 = vadd.f32 %v288, 0.0
      %v321 = vadd.f32 %v289, 0.0
      %v322 = vadd.f32 %v290, 0.0
      %v323 = vadd.f32 %v291, 0.0
      %v324 = vadd.f32 %v292, 0.0
      %v325 = vadd.f32 %v293, 0.0
      %v326 = vadd.f32 %v294, 0.0
      %v327 = vadd.f32 %v295, 0.0
      %v328 = vadd.f32 %v296, 0.0
      %v329 = vadd.f32 %v297, 0.0
      %v330 = vadd.f32 %v298, 0.0
      %v331 = vadd.f32 %v299, 0.0
      %v332 = vadd.f32 %v300, 0.0
      %v333 = vadd.f32 %v301, 0.0
      %v334 = vld [vmem:[%s221 + $0x1] sm:$0x1]
      %v335 = vld [vmem:[%s217 + $0x1] sm:$0xff]
      %v336 = vld [vmem:[%s217 + $0x9] sm:$0xff]
      %v337 = vld [vmem:[%s217 + $0x19] sm:$0xff]
      %v338 = vld [vmem:[%s217 + $0x21] sm:$0xff]
      %v339 = vld [vmem:[%s217 + $0x31] sm:$0xff]
      %v340 = vld [vmem:[%s217 + $0x39] sm:$0xff]
      %v341 = vld [vmem:[%s217 + $0x49] sm:$0xff]
      %v342 = vld [vmem:[%s217 + $0x51] sm:$0xff]
      %v343 = vld [vmem:[%s217 + $0x61] sm:$0xff]
      %v344 = vld [vmem:[%s217 + $0x69] sm:$0xff]
      %v345 = vld [vmem:[%s217 + $0x79] sm:$0xff]
      %v346 = vld [vmem:[%s217 + $0x81] sm:$0xff]
      %v347 = vld [vmem:[%s217 + $0x91] sm:$0xff]
      %v348 = vld [vmem:[%s217 + $0x99] sm:$0xff]
      %v349 = vld [vmem:[%s217 + $0xa9] sm:$0xff]
      %v350 = vld [vmem:[%s217 + $0xb1] sm:$0xff]
      %v351 = vld [vmem:[%s217 + $0xc1] sm:$0xff]
      %v352 = vld [vmem:[%s217 + $0xc9] sm:$0xff]
      %v353 = vld [vmem:[%s217 + $0xd9] sm:$0xff]
      %v354 = vld [vmem:[%s217 + $0xe1] sm:$0xff]
      %v355 = vld [vmem:[%s217 + $0xf1] sm:$0xff]
      %v356 = vld [vmem:[%s217 + $0xf9] sm:$0xff]
      %v357 = vld [vmem:[%s217 + $0x109] sm:$0xff]
      %v358 = vld [vmem:[%s217 + $0x111] sm:$0xff]
      %v359 = vld [vmem:[%s217 + $0x121] sm:$0xff]
      %v360 = vld [vmem:[%s217 + $0x129] sm:$0xff]
      %v361 = vld [vmem:[%s217 + $0x139] sm:$0xff]
      %v362 = vld [vmem:[%s217 + $0x141] sm:$0xff]
      %v363 = vld [vmem:[%s217 + $0x151] sm:$0xff]
      %v364 = vld [vmem:[%s217 + $0x159] sm:$0xff]
      %v365 = vld [vmem:[%s217 + $0x169] sm:$0xff]
      %v366 = vld [vmem:[%s217 + $0x171] sm:$0xff]
      %v367 = vlaneseq
      %v368 = vshrl.u32 %v367, 7
      %v369 = vsub.s32 0, %v368
      %v370 = vrot.slane %v334, %v369
      %v371 = vmul.f32 %v370, %v335
      %v372 = vmul.f32 %v370, %v336
      %v373 = vmul.f32 %v370, %v337
      %v374 = vmul.f32 %v370, %v338
      %v375 = vmul.f32 %v370, %v339
      %v376 = vmul.f32 %v370, %v340
      %v377 = vmul.f32 %v370, %v341
      %v378 = vmul.f32 %v370, %v342
      %v379 = vmul.f32 %v370, %v343
      %v380 = vmul.f32 %v370, %v344
      %v381 = vmul.f32 %v370, %v345
      %v382 = vmul.f32 %v370, %v346
      %v383 = vmul.f32 %v370, %v347
      %v384 = vmul.f32 %v370, %v348
      %v385 = vmul.f32 %v370, %v349
      %v386 = vmul.f32 %v370, %v350
      %v387 = vmul.f32 %v370, %v351
      %v388 = vmul.f32 %v370, %v352
      %v389 = vmul.f32 %v370, %v353
      %v390 = vmul.f32 %v370, %v354
      %v391 = vmul.f32 %v370, %v355
      %v392 = vmul.f32 %v370, %v356
      %v393 = vmul.f32 %v370, %v357
      %v394 = vmul.f32 %v370, %v358
      %v395 = vmul.f32 %v370, %v359
      %v396 = vmul.f32 %v370, %v360
      %v397 = vmul.f32 %v370, %v361
      %v398 = vmul.f32 %v370, %v362
      %v399 = vmul.f32 %v370, %v363
      %v400 = vmul.f32 %v370, %v364
      %v401 = vmul.f32 %v370, %v365
      %v402 = vmul.f32 %v370, %v366
      %v403 = vadd.f32 %v302, %v371
      %v404 = vadd.f32 %v303, %v372
      %v405 = vadd.f32 %v304, %v373
      %v406 = vadd.f32 %v305, %v374
      %v407 = vadd.f32 %v306, %v375
      %v408 = vadd.f32 %v307, %v376
      %v409 = vadd.f32 %v308, %v377
      %v410 = vadd.f32 %v309, %v378
      %v411 = vadd.f32 %v310, %v379
      %v412 = vadd.f32 %v311, %v380
      %v413 = vadd.f32 %v312, %v381
      %v414 = vadd.f32 %v313, %v382
      %v415 = vadd.f32 %v314, %v383
      %v416 = vadd.f32 %v315, %v384
      %v417 = vadd.f32 %v316, %v385
      %v418 = vadd.f32 %v317, %v386
      %v419 = vadd.f32 %v318, %v387
      %v420 = vadd.f32 %v319, %v388
      %v421 = vadd.f32 %v320, %v389
      %v422 = vadd.f32 %v321, %v390
      %v423 = vadd.f32 %v322, %v391
      %v424 = vadd.f32 %v323, %v392
      %v425 = vadd.f32 %v324, %v393
      %v426 = vadd.f32 %v325, %v394
      %v427 = vadd.f32 %v326, %v395
      %v428 = vadd.f32 %v327, %v396
      %v429 = vadd.f32 %v328, %v397
      %v430 = vadd.f32 %v329, %v398
      %v431 = vadd.f32 %v330, %v399
      %v432 = vadd.f32 %v331, %v400
      %v433 = vadd.f32 %v332, %v401
      %v434 = vadd.f32 %v333, %v402
      %v435 = vld [vmem:[%s221 + $0x2] sm:$0x1]
      %v436 = vld [vmem:[%s217 + $0x2] sm:$0xff]
      %v437 = vld [vmem:[%s217 + $0xa] sm:$0xff]
      %v438 = vld [vmem:[%s217 + $0x1a] sm:$0xff]
      %v439 = vld [vmem:[%s217 + $0x22] sm:$0xff]
      %v440 = vld [vmem:[%s217 + $0x32] sm:$0xff]
      %v441 = vld [vmem:[%s217 + $0x3a] sm:$0xff]
      %v442 = vld [vmem:[%s217 + $0x4a] sm:$0xff]
      %v443 = vld [vmem:[%s217 + $0x52] sm:$0xff]
      %v444 = vld [vmem:[%s217 + $0x62] sm:$0xff]
      %v445 = vld [vmem:[%s217 + $0x6a] sm:$0xff]
      %v446 = vld [vmem:[%s217 + $0x7a] sm:$0xff]
      %v447 = vld [vmem:[%s217 + $0x82] sm:$0xff]
      %v448 = vld [vmem:[%s217 + $0x92] sm:$0xff]
      %v449 = vld [vmem:[%s217 + $0x9a] sm:$0xff]
      %v450 = vld [vmem:[%s217 + $0xaa] sm:$0xff]
      %v451 = vld [vmem:[%s217 + $0xb2] sm:$0xff]
      %v452 = vld [vmem:[%s217 + $0xc2] sm:$0xff]
      %v453 = vld [vmem:[%s217 + $0xca] sm:$0xff]
      %v454 = vld [vmem:[%s217 + $0xda] sm:$0xff]
      %v455 = vld [vmem:[%s217 + $0xe2] sm:$0xff]
      %v456 = vld [vmem:[%s217 + $0xf2] sm:$0xff]
      %v457 = vld [vmem:[%s217 + $0xfa] sm:$0xff]
      %v458 = vld [vmem:[%s217 + $0x10a] sm:$0xff]
      %v459 = vld [vmem:[%s217 + $0x112] sm:$0xff]
      %v460 = vld [vmem:[%s217 + $0x122] sm:$0xff]
      %v461 = vld [vmem:[%s217 + $0x12a] sm:$0xff]
      %v462 = vld [vmem:[%s217 + $0x13a] sm:$0xff]
      %v463 = vld [vmem:[%s217 + $0x142] sm:$0xff]
      %v464 = vld [vmem:[%s217 + $0x152] sm:$0xff]
      %v465 = vld [vmem:[%s217 + $0x15a] sm:$0xff]
      %v466 = vld [vmem:[%s217 + $0x16a] sm:$0xff]
      %v467 = vld [vmem:[%s217 + $0x172] sm:$0xff]
      %v468 = vlaneseq
      %v469 = vshrl.u32 %v468, 7
      %v470 = vsub.s32 0, %v469
      %v471 = vrot.slane %v435, %v470
      %v472 = vmul.f32 %v471, %v436
      %v473 = vmul.f32 %v471, %v437
      %v474 = vmul.f32 %v471, %v438
      %v475 = vmul.f32 %v471, %v439
      %v476 = vmul.f32 %v471, %v440
      %v477 = vmul.f32 %v471, %v441
      %v478 = vmul.f32 %v471, %v442
      %v479 = vmul.f32 %v471, %v443
      %v480 = vmul.f32 %v471, %v444
      %v481 = vmul.f32 %v471, %v445
      %v482 = vmul.f32 %v471, %v446
      %v483 = vmul.f32 %v471, %v447
      %v484 = vmul.f32 %v471, %v448
      %v485 = vmul.f32 %v471, %v449
      %v486 = vmul.f32 %v471, %v450
      %v487 = vmul.f32 %v471, %v451
      %v488 = vmul.f32 %v471, %v452
      %v489 = vmul.f32 %v471, %v453
      %v490 = vmul.f32 %v471, %v454
      %v491 = vmul.f32 %v471, %v455
      %v492 = vmul.f32 %v471, %v456
      %v493 = vmul.f32 %v471, %v457
      %v494 = vmul.f32 %v471, %v458
      %v495 = vmul.f32 %v471, %v459
      %v496 = vmul.f32 %v471, %v460
      %v497 = vmul.f32 %v471, %v461
      %v498 = vmul.f32 %v471, %v462
      %v499 = vmul.f32 %v471, %v463
      %v500 = vmul.f32 %v471, %v464
      %v501 = vmul.f32 %v471, %v465
      %v502 = vmul.f32 %v471, %v466
      %v503 = vmul.f32 %v471, %v467
      %v504 = vadd.f32 %v403, %v472
      %v505 = vadd.f32 %v404, %v473
      %v506 = vadd.f32 %v405, %v474
      %v507 = vadd.f32 %v406, %v475
      %v508 = vadd.f32 %v407, %v476
      %v509 = vadd.f32 %v408, %v477
      %v510 = vadd.f32 %v409, %v478
      %v511 = vadd.f32 %v410, %v479
      %v512 = vadd.f32 %v411, %v480
      %v513 = vadd.f32 %v412, %v481
      %v514 = vadd.f32 %v413, %v482
      %v515 = vadd.f32 %v414, %v483
      %v516 = vadd.f32 %v415, %v484
      %v517 = vadd.f32 %v416, %v485
      %v518 = vadd.f32 %v417, %v486
      %v519 = vadd.f32 %v418, %v487
      %v520 = vadd.f32 %v419, %v488
      %v521 = vadd.f32 %v420, %v489
      %v522 = vadd.f32 %v421, %v490
      %v523 = vadd.f32 %v422, %v491
      %v524 = vadd.f32 %v423, %v492
      %v525 = vadd.f32 %v424, %v493
      %v526 = vadd.f32 %v425, %v494
      %v527 = vadd.f32 %v426, %v495
      %v528 = vadd.f32 %v427, %v496
      %v529 = vadd.f32 %v428, %v497
      %v530 = vadd.f32 %v429, %v498
      %v531 = vadd.f32 %v430, %v499
      %v532 = vadd.f32 %v431, %v500
      %v533 = vadd.f32 %v432, %v501
      %v534 = vadd.f32 %v433, %v502
      %v535 = vadd.f32 %v434, %v503
      %s536 = scalar_lea.vmem %s221, 4
      %v537 = vld [vmem:[%s536] sm:$0x1]
      %s538 = scalar_lea.vmem %s217, 24
      %v539 = vld [vmem:[%s538] sm:$0xff]
      %v540 = vld [vmem:[%s538 + $0x8] sm:$0xff]
      %v541 = vld [vmem:[%s538 + $0x18] sm:$0xff]
      %v542 = vld [vmem:[%s538 + $0x20] sm:$0xff]
      %v543 = vld [vmem:[%s538 + $0x30] sm:$0xff]
      %v544 = vld [vmem:[%s538 + $0x38] sm:$0xff]
      %v545 = vld [vmem:[%s538 + $0x48] sm:$0xff]
      %v546 = vld [vmem:[%s538 + $0x50] sm:$0xff]
      %v547 = vld [vmem:[%s538 + $0x60] sm:$0xff]
      %v548 = vld [vmem:[%s538 + $0x68] sm:$0xff]
      %v549 = vld [vmem:[%s538 + $0x78] sm:$0xff]
      %v550 = vld [vmem:[%s538 + $0x80] sm:$0xff]
      %v551 = vld [vmem:[%s538 + $0x90] sm:$0xff]
      %v552 = vld [vmem:[%s538 + $0x98] sm:$0xff]
      %v553 = vld [vmem:[%s538 + $0xa8] sm:$0xff]
      %v554 = vld [vmem:[%s538 + $0xb0] sm:$0xff]
      %v555 = vld [vmem:[%s538 + $0xc0] sm:$0xff]
      %v556 = vld [vmem:[%s538 + $0xc8] sm:$0xff]
      %v557 = vld [vmem:[%s538 + $0xd8] sm:$0xff]
      %v558 = vld [vmem:[%s538 + $0xe0] sm:$0xff]
      %v559 = vld [vmem:[%s538 + $0xf0] sm:$0xff]
      %v560 = vld [vmem:[%s538 + $0xf8] sm:$0xff]
      %v561 = vld [vmem:[%s538 + $0x108] sm:$0xff]
      %v562 = vld [vmem:[%s538 + $0x110] sm:$0xff]
      %v563 = vld [vmem:[%s538 + $0x120] sm:$0xff]
      %v564 = vld [vmem:[%s538 + $0x128] sm:$0xff]
      %v565 = vld [vmem:[%s538 + $0x138] sm:$0xff]
      %v566 = vld [vmem:[%s538 + $0x140] sm:$0xff]
      %v567 = vld [vmem:[%s538 + $0x150] sm:$0xff]
      %v568 = vld [vmem:[%s538 + $0x158] sm:$0xff]
      %v569 = vld [vmem:[%s538 + $0x168] sm:$0xff]
      %v570 = vld [vmem:[%s538 + $0x170] sm:$0xff]
      %v571 = vlaneseq
      %v572 = vshrl.u32 %v571, 7
      %v573 = vsub.s32 0, %v572
      %v574 = vrot.slane %v537, %v573
      %v575 = vmul.f32 %v574, %v539
      %v576 = vmul.f32 %v574, %v540
      %v577 = vmul.f32 %v574, %v541
      %v578 = vmul.f32 %v574, %v542
      %v579 = vmul.f32 %v574, %v543
      %v580 = vmul.f32 %v574, %v544
      %v581 = vmul.f32 %v574, %v545
      %v582 = vmul.f32 %v574, %v546
      %v583 = vmul.f32 %v574, %v547
      %v584 = vmul.f32 %v574, %v548
      %v585 = vmul.f32 %v574, %v549
      %v586 = vmul.f32 %v574, %v550
      %v587 = vmul.f32 %v574, %v551
      %v588 = vmul.f32 %v574, %v552
      %v589 = vmul.f32 %v574, %v553
      %v590 = vmul.f32 %v574, %v554
      %v591 = vmul.f32 %v574, %v555
      %v592 = vmul.f32 %v574, %v556
      %v593 = vmul.f32 %v574, %v557
      %v594 = vmul.f32 %v574, %v558
      %v595 = vmul.f32 %v574, %v559
      %v596 = vmul.f32 %v574, %v560
      %v597 = vmul.f32 %v574, %v561
      %v598 = vmul.f32 %v574, %v562
      %v599 = vmul.f32 %v574, %v563
      %v600 = vmul.f32 %v574, %v564
      %v601 = vmul.f32 %v574, %v565
      %v602 = vmul.f32 %v574, %v566
      %v603 = vmul.f32 %v574, %v567
      %v604 = vmul.f32 %v574, %v568
      %v605 = vmul.f32 %v574, %v569
      %v606 = vmul.f32 %v574, %v570
      %v607 = vadd.f32 %v504, %v575
      %v608 = vadd.f32 %v505, %v576
      %v609 = vadd.f32 %v506, %v577
      %v610 = vadd.f32 %v507, %v578
      %v611 = vadd.f32 %v508, %v579
      %v612 = vadd.f32 %v509, %v580
      %v613 = vadd.f32 %v510, %v581
      %v614 = vadd.f32 %v511, %v582
      %v615 = vadd.f32 %v512, %v583
      %v616 = vadd.f32 %v513, %v584
      %v617 = vadd.f32 %v514, %v585
      %v618 = vadd.f32 %v515, %v586
      %v619 = vadd.f32 %v516, %v587
      %v620 = vadd.f32 %v517, %v588
      %v621 = vadd.f32 %v518, %v589
      %v622 = vadd.f32 %v519, %v590
      %v623 = vadd.f32 %v520, %v591
      %v624 = vadd.f32 %v521, %v592
      %v625 = vadd.f32 %v522, %v593
      %v626 = vadd.f32 %v523, %v594
      %v627 = vadd.f32 %v524, %v595
      %v628 = vadd.f32 %v525, %v596
      %v629 = vadd.f32 %v526, %v597
      %v630 = vadd.f32 %v527, %v598
      %v631 = vadd.f32 %v528, %v599
      %v632 = vadd.f32 %v529, %v600
      %v633 = vadd.f32 %v530, %v601
      %v634 = vadd.f32 %v531, %v602
      %v635 = vadd.f32 %v532, %v603
      %v636 = vadd.f32 %v533, %v604
      %v637 = vadd.f32 %v534, %v605
      %v638 = vadd.f32 %v535, %v606
      %v639 = vld [vmem:[%s536 + $0x1] sm:$0x1]
      %v640 = vld [vmem:[%s538 + $0x1] sm:$0xff]
      %v641 = vld [vmem:[%s538 + $0x9] sm:$0xff]
      %v642 = vld [vmem:[%s538 + $0x19] sm:$0xff]
      %v643 = vld [vmem:[%s538 + $0x21] sm:$0xff]
      %v644 = vld [vmem:[%s538 + $0x31] sm:$0xff]
      %v645 = vld [vmem:[%s538 + $0x39] sm:$0xff]
      %v646 = vld [vmem:[%s538 + $0x49] sm:$0xff]
      %v647 = vld [vmem:[%s538 + $0x51] sm:$0xff]
      %v648 = vld [vmem:[%s538 + $0x61] sm:$0xff]
      %v649 = vld [vmem:[%s538 + $0x69] sm:$0xff]
      %v650 = vld [vmem:[%s538 + $0x79] sm:$0xff]
      %v651 = vld [vmem:[%s538 + $0x81] sm:$0xff]
      %v652 = vld [vmem:[%s538 + $0x91] sm:$0xff]
      %v653 = vld [vmem:[%s538 + $0x99] sm:$0xff]
      %v654 = vld [vmem:[%s538 + $0xa9] sm:$0xff]
      %v655 = vld [vmem:[%s538 + $0xb1] sm:$0xff]
      %v656 = vld [vmem:[%s538 + $0xc1] sm:$0xff]
      %v657 = vld [vmem:[%s538 + $0xc9] sm:$0xff]
      %v658 = vld [vmem:[%s538 + $0xd9] sm:$0xff]
      %v659 = vld [vmem:[%s538 + $0xe1] sm:$0xff]
      %v660 = vld [vmem:[%s538 + $0xf1] sm:$0xff]
      %v661 = vld [vmem:[%s538 + $0xf9] sm:$0xff]
      %v662 = vld [vmem:[%s538 + $0x109] sm:$0xff]
      %v663 = vld [vmem:[%s538 + $0x111] sm:$0xff]
      %v664 = vld [vmem:[%s538 + $0x121] sm:$0xff]
      %v665 = vld [vmem:[%s538 + $0x129] sm:$0xff]
      %v666 = vld [vmem:[%s538 + $0x139] sm:$0xff]
      %v667 = vld [vmem:[%s538 + $0x141] sm:$0xff]
      %v668 = vld [vmem:[%s538 + $0x151] sm:$0xff]
      %v669 = vld [vmem:[%s538 + $0x159] sm:$0xff]
      %v670 = vld [vmem:[%s538 + $0x169] sm:$0xff]
      %v671 = vld [vmem:[%s538 + $0x171] sm:$0xff]
      %v672 = vlaneseq
      %v673 = vshrl.u32 %v672, 7
      %v674 = vsub.s32 0, %v673
      %v675 = vrot.slane %v639, %v674
      %v676 = vmul.f32 %v675, %v640
      %v677 = vmul.f32 %v675, %v641
      %v678 = vmul.f32 %v675, %v642
      %v679 = vmul.f32 %v675, %v643
      %v680 = vmul.f32 %v675, %v644
      %v681 = vmul.f32 %v675, %v645
      %v682 = vmul.f32 %v675, %v646
      %v683 = vmul.f32 %v675, %v647
      %v684 = vmul.f32 %v675, %v648
      %v685 = vmul.f32 %v675, %v649
      %v686 = vmul.f32 %v675, %v650
      %v687 = vmul.f32 %v675, %v651
      %v688 = vmul.f32 %v675, %v652
      %v689 = vmul.f32 %v675, %v653
      %v690 = vmul.f32 %v675, %v654
      %v691 = vmul.f32 %v675, %v655
      %v692 = vmul.f32 %v675, %v656
      %v693 = vmul.f32 %v675, %v657
      %v694 = vmul.f32 %v675, %v658
      %v695 = vmul.f32 %v675, %v659
      %v696 = vmul.f32 %v675, %v660
      %v697 = vmul.f32 %v675, %v661
      %v698 = vmul.f32 %v675, %v662
      %v699 = vmul.f32 %v675, %v663
      %v700 = vmul.f32 %v675, %v664
      %v701 = vmul.f32 %v675, %v665
      %v702 = vmul.f32 %v675, %v666
      %v703 = vmul.f32 %v675, %v667
      %v704 = vmul.f32 %v675, %v668
      %v705 = vmul.f32 %v675, %v669
      %v706 = vmul.f32 %v675, %v670
      %v707 = vmul.f32 %v675, %v671
      %v708 = vadd.f32 %v607, %v676
      %v709 = vadd.f32 %v608, %v677
      %v710 = vadd.f32 %v609, %v678
      %v711 = vadd.f32 %v610, %v679
      %v712 = vadd.f32 %v611, %v680
      %v713 = vadd.f32 %v612, %v681
      %v714 = vadd.f32 %v613, %v682
      %v715 = vadd.f32 %v614, %v683
      %v716 = vadd.f32 %v615, %v684
      %v717 = vadd.f32 %v616, %v685
      %v718 = vadd.f32 %v617, %v686
      %v719 = vadd.f32 %v618, %v687
      %v720 = vadd.f32 %v619, %v688
      %v721 = vadd.f32 %v620, %v689
      %v722 = vadd.f32 %v621, %v690
      %v723 = vadd.f32 %v622, %v691
      %v724 = vadd.f32 %v623, %v692
      %v725 = vadd.f32 %v624, %v693
      %v726 = vadd.f32 %v625, %v694
      %v727 = vadd.f32 %v626, %v695
      %v728 = vadd.f32 %v627, %v696
      %v729 = vadd.f32 %v628, %v697
      %v730 = vadd.f32 %v629, %v698
      %v731 = vadd.f32 %v630, %v699
      %v732 = vadd.f32 %v631, %v700
      %v733 = vadd.f32 %v632, %v701
      %v734 = vadd.f32 %v633, %v702
      %v735 = vadd.f32 %v634, %v703
      %v736 = vadd.f32 %v635, %v704
      %v737 = vadd.f32 %v636, %v705
      %v738 = vadd.f32 %v637, %v706
      %v739 = vadd.f32 %v638, %v707
      %v740 = vld [vmem:[%s536 + $0x2] sm:$0x1]
      %v741 = vld [vmem:[%s538 + $0x2] sm:$0xff]
      %v742 = vld [vmem:[%s538 + $0xa] sm:$0xff]
      %v743 = vld [vmem:[%s538 + $0x1a] sm:$0xff]
      %v744 = vld [vmem:[%s538 + $0x22] sm:$0xff]
      %v745 = vld [vmem:[%s538 + $0x32] sm:$0xff]
      %v746 = vld [vmem:[%s538 + $0x3a] sm:$0xff]
      %v747 = vld [vmem:[%s538 + $0x4a] sm:$0xff]
      %v748 = vld [vmem:[%s538 + $0x52] sm:$0xff]
      %v749 = vld [vmem:[%s538 + $0x62] sm:$0xff]
      %v750 = vld [vmem:[%s538 + $0x6a] sm:$0xff]
      %v751 = vld [vmem:[%s538 + $0x7a] sm:$0xff]
      %v752 = vld [vmem:[%s538 + $0x82] sm:$0xff]
      %v753 = vld [vmem:[%s538 + $0x92] sm:$0xff]
      %v754 = vld [vmem:[%s538 + $0x9a] sm:$0xff]
      %v755 = vld [vmem:[%s538 + $0xaa] sm:$0xff]
      %v756 = vld [vmem:[%s538 + $0xb2] sm:$0xff]
      %v757 = vld [vmem:[%s538 + $0xc2] sm:$0xff]
      %v758 = vld [vmem:[%s538 + $0xca] sm:$0xff]
      %v759 = vld [vmem:[%s538 + $0xda] sm:$0xff]
      %v760 = vld [vmem:[%s538 + $0xe2] sm:$0xff]
      %v761 = vld [vmem:[%s538 + $0xf2] sm:$0xff]
      %v762 = vld [vmem:[%s538 + $0xfa] sm:$0xff]
      %v763 = vld [vmem:[%s538 + $0x10a] sm:$0xff]
      %v764 = vld [vmem:[%s538 + $0x112] sm:$0xff]
      %v765 = vld [vmem:[%s538 + $0x122] sm:$0xff]
      %v766 = vld [vmem:[%s538 + $0x12a] sm:$0xff]
      %v767 = vld [vmem:[%s538 + $0x13a] sm:$0xff]
      %v768 = vld [vmem:[%s538 + $0x142] sm:$0xff]
      %v769 = vld [vmem:[%s538 + $0x152] sm:$0xff]
      %v770 = vld [vmem:[%s538 + $0x15a] sm:$0xff]
      %v771 = vld [vmem:[%s538 + $0x16a] sm:$0xff]
      %v772 = vld [vmem:[%s538 + $0x172] sm:$0xff]
      %v773 = vlaneseq
      %v774 = vshrl.u32 %v773, 7
      %v775 = vsub.s32 0, %v774
      %v776 = vrot.slane %v740, %v775
      %v777 = vmul.f32 %v776, %v741
      %v778 = vmul.f32 %v776, %v742
      %v779 = vmul.f32 %v776, %v743
      %v780 = vmul.f32 %v776, %v744
      %v781 = vmul.f32 %v776, %v745
      %v782 = vmul.f32 %v776, %v746
      %v783 = vmul.f32 %v776, %v747
      %v784 = vmul.f32 %v776, %v748
      %v785 = vmul.f32 %v776, %v749
      %v786 = vmul.f32 %v776, %v750
      %v787 = vmul.f32 %v776, %v751
      %v788 = vmul.f32 %v776, %v752
      %v789 = vmul.f32 %v776, %v753
      %v790 = vmul.f32 %v776, %v754
      %v791 = vmul.f32 %v776, %v755
      %v792 = vmul.f32 %v776, %v756
      %v793 = vmul.f32 %v776, %v757
      %v794 = vmul.f32 %v776, %v758
      %v795 = vmul.f32 %v776, %v759
      %v796 = vmul.f32 %v776, %v760
      %v797 = vmul.f32 %v776, %v761
      %v798 = vmul.f32 %v776, %v762
      %v799 = vmul.f32 %v776, %v763
      %v800 = vmul.f32 %v776, %v764
      %v801 = vmul.f32 %v776, %v765
      %v802 = vmul.f32 %v776, %v766
      %v803 = vmul.f32 %v776, %v767
      %v804 = vmul.f32 %v776, %v768
      %v805 = vmul.f32 %v776, %v769
      %v806 = vmul.f32 %v776, %v770
      %v807 = vmul.f32 %v776, %v771
      %v808 = vmul.f32 %v776, %v772
      %v809 = vadd.f32 %v708, %v777
      %v810 = vadd.f32 %v709, %v778
      %v811 = vadd.f32 %v710, %v779
      %v812 = vadd.f32 %v711, %v780
      %v813 = vadd.f32 %v712, %v781
      %v814 = vadd.f32 %v713, %v782
      %v815 = vadd.f32 %v714, %v783
      %v816 = vadd.f32 %v715, %v784
      %v817 = vadd.f32 %v716, %v785
      %v818 = vadd.f32 %v717, %v786
      %v819 = vadd.f32 %v718, %v787
      %v820 = vadd.f32 %v719, %v788
      %v821 = vadd.f32 %v720, %v789
      %v822 = vadd.f32 %v721, %v790
      %v823 = vadd.f32 %v722, %v791
      %v824 = vadd.f32 %v723, %v792
      %v825 = vadd.f32 %v724, %v793
      %v826 = vadd.f32 %v725, %v794
      %v827 = vadd.f32 %v726, %v795
      %v828 = vadd.f32 %v727, %v796
      %v829 = vadd.f32 %v728, %v797
      %v830 = vadd.f32 %v729, %v798
      %v831 = vadd.f32 %v730, %v799
      %v832 = vadd.f32 %v731, %v800
      %v833 = vadd.f32 %v732, %v801
      %v834 = vadd.f32 %v733, %v802
      %v835 = vadd.f32 %v734, %v803
      %v836 = vadd.f32 %v735, %v804
      %v837 = vadd.f32 %v736, %v805
      %v838 = vadd.f32 %v737, %v806
      %v839 = vadd.f32 %v738, %v807
      %v840 = vadd.f32 %v739, %v808
      %s841 = scalar_lea.vmem %s221, 8
      %v842 = vld [vmem:[%s841] sm:$0x1]
      %s843 = scalar_lea.vmem %s217, 48
      %v844 = vld [vmem:[%s843] sm:$0xff]
      %v845 = vld [vmem:[%s843 + $0x8] sm:$0xff]
      %v846 = vld [vmem:[%s843 + $0x18] sm:$0xff]
      %v847 = vld [vmem:[%s843 + $0x20] sm:$0xff]
      %v848 = vld [vmem:[%s843 + $0x30] sm:$0xff]
      %v849 = vld [vmem:[%s843 + $0x38] sm:$0xff]
      %v850 = vld [vmem:[%s843 + $0x48] sm:$0xff]
      %v851 = vld [vmem:[%s843 + $0x50] sm:$0xff]
      %v852 = vld [vmem:[%s843 + $0x60] sm:$0xff]
      %v853 = vld [vmem:[%s843 + $0x68] sm:$0xff]
      %v854 = vld [vmem:[%s843 + $0x78] sm:$0xff]
      %v855 = vld [vmem:[%s843 + $0x80] sm:$0xff]
      %v856 = vld [vmem:[%s843 + $0x90] sm:$0xff]
      %v857 = vld [vmem:[%s843 + $0x98] sm:$0xff]
      %v858 = vld [vmem:[%s843 + $0xa8] sm:$0xff]
      %v859 = vld [vmem:[%s843 + $0xb0] sm:$0xff]
      %v860 = vld [vmem:[%s843 + $0xc0] sm:$0xff]
      %v861 = vld [vmem:[%s843 + $0xc8] sm:$0xff]
      %v862 = vld [vmem:[%s843 + $0xd8] sm:$0xff]
      %v863 = vld [vmem:[%s843 + $0xe0] sm:$0xff]
      %v864 = vld [vmem:[%s843 + $0xf0] sm:$0xff]
      %v865 = vld [vmem:[%s843 + $0xf8] sm:$0xff]
      %v866 = vld [vmem:[%s843 + $0x108] sm:$0xff]
      %v867 = vld [vmem:[%s843 + $0x110] sm:$0xff]
      %v868 = vld [vmem:[%s843 + $0x120] sm:$0xff]
      %v869 = vld [vmem:[%s843 + $0x128] sm:$0xff]
      %v870 = vld [vmem:[%s843 + $0x138] sm:$0xff]
      %v871 = vld [vmem:[%s843 + $0x140] sm:$0xff]
      %v872 = vld [vmem:[%s843 + $0x150] sm:$0xff]
      %v873 = vld [vmem:[%s843 + $0x158] sm:$0xff]
      %v874 = vld [vmem:[%s843 + $0x168] sm:$0xff]
      %v875 = vld [vmem:[%s843 + $0x170] sm:$0xff]
      %v876 = vlaneseq
      %v877 = vshrl.u32 %v876, 7
      %v878 = vsub.s32 0, %v877
      %v879 = vrot.slane %v842, %v878
      %v880 = vmul.f32 %v879, %v844
      %v881 = vmul.f32 %v879, %v845
      %v882 = vmul.f32 %v879, %v846
      %v883 = vmul.f32 %v879, %v847
      %v884 = vmul.f32 %v879, %v848
      %v885 = vmul.f32 %v879, %v849
      %v886 = vmul.f32 %v879, %v850
      %v887 = vmul.f32 %v879, %v851
      %v888 = vmul.f32 %v879, %v852
      %v889 = vmul.f32 %v879, %v853
      %v890 = vmul.f32 %v879, %v854
      %v891 = vmul.f32 %v879, %v855
      %v892 = vmul.f32 %v879, %v856
      %v893 = vmul.f32 %v879, %v857
      %v894 = vmul.f32 %v879, %v858
      %v895 = vmul.f32 %v879, %v859
      %v896 = vmul.f32 %v879, %v860
      %v897 = vmul.f32 %v879, %v861
      %v898 = vmul.f32 %v879, %v862
      %v899 = vmul.f32 %v879, %v863
      %v900 = vmul.f32 %v879, %v864
      %v901 = vmul.f32 %v879, %v865
      %v902 = vmul.f32 %v879, %v866
      %v903 = vmul.f32 %v879, %v867
      %v904 = vmul.f32 %v879, %v868
      %v905 = vmul.f32 %v879, %v869
      %v906 = vmul.f32 %v879, %v870
      %v907 = vmul.f32 %v879, %v871
      %v908 = vmul.f32 %v879, %v872
      %v909 = vmul.f32 %v879, %v873
      %v910 = vmul.f32 %v879, %v874
      %v911 = vmul.f32 %v879, %v875
      %v912 = vadd.f32 %v809, %v880
      %v913 = vadd.f32 %v810, %v881
      %v914 = vadd.f32 %v811, %v882
      %v915 = vadd.f32 %v812, %v883
      %v916 = vadd.f32 %v813, %v884
      %v917 = vadd.f32 %v814, %v885
      %v918 = vadd.f32 %v815, %v886
      %v919 = vadd.f32 %v816, %v887
      %v920 = vadd.f32 %v817, %v888
      %v921 = vadd.f32 %v818, %v889
      %v922 = vadd.f32 %v819, %v890
      %v923 = vadd.f32 %v820, %v891
      %v924 = vadd.f32 %v821, %v892
      %v925 = vadd.f32 %v822, %v893
      %v926 = vadd.f32 %v823, %v894
      %v927 = vadd.f32 %v824, %v895
      %v928 = vadd.f32 %v825, %v896
      %v929 = vadd.f32 %v826, %v897
      %v930 = vadd.f32 %v827, %v898
      %v931 = vadd.f32 %v828, %v899
      %v932 = vadd.f32 %v829, %v900
      %v933 = vadd.f32 %v830, %v901
      %v934 = vadd.f32 %v831, %v902
      %v935 = vadd.f32 %v832, %v903
      %v936 = vadd.f32 %v833, %v904
      %v937 = vadd.f32 %v834, %v905
      %v938 = vadd.f32 %v835, %v906
      %v939 = vadd.f32 %v836, %v907
      %v940 = vadd.f32 %v837, %v908
      %v941 = vadd.f32 %v838, %v909
      %v942 = vadd.f32 %v839, %v910
      %v943 = vadd.f32 %v840, %v911
      %v944 = vld [vmem:[%s841 + $0x1] sm:$0x1]
      %v945 = vld [vmem:[%s843 + $0x1] sm:$0xff]
      %v946 = vld [vmem:[%s843 + $0x9] sm:$0xff]
      %v947 = vld [vmem:[%s843 + $0x19] sm:$0xff]
      %v948 = vld [vmem:[%s843 + $0x21] sm:$0xff]
      %v949 = vld [vmem:[%s843 + $0x31] sm:$0xff]
      %v950 = vld [vmem:[%s843 + $0x39] sm:$0xff]
      %v951 = vld [vmem:[%s843 + $0x49] sm:$0xff]
      %v952 = vld [vmem:[%s843 + $0x51] sm:$0xff]
      %v953 = vld [vmem:[%s843 + $0x61] sm:$0xff]
      %v954 = vld [vmem:[%s843 + $0x69] sm:$0xff]
      %v955 = vld [vmem:[%s843 + $0x79] sm:$0xff]
      %v956 = vld [vmem:[%s843 + $0x81] sm:$0xff]
      %v957 = vld [vmem:[%s843 + $0x91] sm:$0xff]
      %v958 = vld [vmem:[%s843 + $0x99] sm:$0xff]
      %v959 = vld [vmem:[%s843 + $0xa9] sm:$0xff]
      %v960 = vld [vmem:[%s843 + $0xb1] sm:$0xff]
      %v961 = vld [vmem:[%s843 + $0xc1] sm:$0xff]
      %v962 = vld [vmem:[%s843 + $0xc9] sm:$0xff]
      %v963 = vld [vmem:[%s843 + $0xd9] sm:$0xff]
      %v964 = vld [vmem:[%s843 + $0xe1] sm:$0xff]
      %v965 = vld [vmem:[%s843 + $0xf1] sm:$0xff]
      %v966 = vld [vmem:[%s843 + $0xf9] sm:$0xff]
      %v967 = vld [vmem:[%s843 + $0x109] sm:$0xff]
      %v968 = vld [vmem:[%s843 + $0x111] sm:$0xff]
      %v969 = vld [vmem:[%s843 + $0x121] sm:$0xff]
      %v970 = vld [vmem:[%s843 + $0x129] sm:$0xff]
      %v971 = vld [vmem:[%s843 + $0x139] sm:$0xff]
      %v972 = vld [vmem:[%s843 + $0x141] sm:$0xff]
      %v973 = vld [vmem:[%s843 + $0x151] sm:$0xff]
      %v974 = vld [vmem:[%s843 + $0x159] sm:$0xff]
      %v975 = vld [vmem:[%s843 + $0x169] sm:$0xff]
      %v976 = vld [vmem:[%s843 + $0x171] sm:$0xff]
      %v977 = vlaneseq
      %v978 = vshrl.u32 %v977, 7
      %v979 = vsub.s32 0, %v978
      %v980 = vrot.slane %v944, %v979
      %v981 = vmul.f32 %v980, %v945
      %v982 = vmul.f32 %v980, %v946
      %v983 = vmul.f32 %v980, %v947
      %v984 = vmul.f32 %v980, %v948
      %v985 = vmul.f32 %v980, %v949
      %v986 = vmul.f32 %v980, %v950
      %v987 = vmul.f32 %v980, %v951
      %v988 = vmul.f32 %v980, %v952
      %v989 = vmul.f32 %v980, %v953
      %v990 = vmul.f32 %v980, %v954
      %v991 = vmul.f32 %v980, %v955
      %v992 = vmul.f32 %v980, %v956
      %v993 = vmul.f32 %v980, %v957
      %v994 = vmul.f32 %v980, %v958
      %v995 = vmul.f32 %v980, %v959
      %v996 = vmul.f32 %v980, %v960
      %v997 = vmul.f32 %v980, %v961
      %v998 = vmul.f32 %v980, %v962
      %v999 = vmul.f32 %v980, %v963
      %v1000 = vmul.f32 %v980, %v964
      %v1001 = vmul.f32 %v980, %v965
      %v1002 = vmul.f32 %v980, %v966
      %v1003 = vmul.f32 %v980, %v967
      %v1004 = vmul.f32 %v980, %v968
      %v1005 = vmul.f32 %v980, %v969
      %v1006 = vmul.f32 %v980, %v970
      %v1007 = vmul.f32 %v980, %v971
      %v1008 = vmul.f32 %v980, %v972
      %v1009 = vmul.f32 %v980, %v973
      %v1010 = vmul.f32 %v980, %v974
      %v1011 = vmul.f32 %v980, %v975
      %v1012 = vmul.f32 %v980, %v976
      %v1013 = vadd.f32 %v912, %v981
      %v1014 = vadd.f32 %v913, %v982
      %v1015 = vadd.f32 %v914, %v983
      %v1016 = vadd.f32 %v915, %v984
      %v1017 = vadd.f32 %v916, %v985
      %v1018 = vadd.f32 %v917, %v986
      %v1019 = vadd.f32 %v918, %v987
      %v1020 = vadd.f32 %v919, %v988
      %v1021 = vadd.f32 %v920, %v989
      %v1022 = vadd.f32 %v921, %v990
      %v1023 = vadd.f32 %v922, %v991
      %v1024 = vadd.f32 %v923, %v992
      %v1025 = vadd.f32 %v924, %v993
      %v1026 = vadd.f32 %v925, %v994
      %v1027 = vadd.f32 %v926, %v995
      %v1028 = vadd.f32 %v927, %v996
      %v1029 = vadd.f32 %v928, %v997
      %v1030 = vadd.f32 %v929, %v998
      %v1031 = vadd.f32 %v930, %v999
      %v1032 = vadd.f32 %v931, %v1000
      %v1033 = vadd.f32 %v932, %v1001
      %v1034 = vadd.f32 %v933, %v1002
      %v1035 = vadd.f32 %v934, %v1003
      %v1036 = vadd.f32 %v935, %v1004
      %v1037 = vadd.f32 %v936, %v1005
      %v1038 = vadd.f32 %v937, %v1006
      %v1039 = vadd.f32 %v938, %v1007
      %v1040 = vadd.f32 %v939, %v1008
      %v1041 = vadd.f32 %v940, %v1009
      %v1042 = vadd.f32 %v941, %v1010
      %v1043 = vadd.f32 %v942, %v1011
      %v1044 = vadd.f32 %v943, %v1012
      %v1045 = vld [vmem:[%s841 + $0x2] sm:$0x1]
      %v1046 = vld [vmem:[%s843 + $0x2] sm:$0xff]
      %v1047 = vld [vmem:[%s843 + $0xa] sm:$0xff]
      %v1048 = vld [vmem:[%s843 + $0x1a] sm:$0xff]
      %v1049 = vld [vmem:[%s843 + $0x22] sm:$0xff]
      %v1050 = vld [vmem:[%s843 + $0x32] sm:$0xff]
      %v1051 = vld [vmem:[%s843 + $0x3a] sm:$0xff]
      %v1052 = vld [vmem:[%s843 + $0x4a] sm:$0xff]
      %v1053 = vld [vmem:[%s843 + $0x52] sm:$0xff]
      %v1054 = vld [vmem:[%s843 + $0x62] sm:$0xff]
      %v1055 = vld [vmem:[%s843 + $0x6a] sm:$0xff]
      %v1056 = vld [vmem:[%s843 + $0x7a] sm:$0xff]
      %v1057 = vld [vmem:[%s843 + $0x82] sm:$0xff]
      %v1058 = vld [vmem:[%s843 + $0x92] sm:$0xff]
      %v1059 = vld [vmem:[%s843 + $0x9a] sm:$0xff]
      %v1060 = vld [vmem:[%s843 + $0xaa] sm:$0xff]
      %v1061 = vld [vmem:[%s843 + $0xb2] sm:$0xff]
      %v1062 = vld [vmem:[%s843 + $0xc2] sm:$0xff]
      %v1063 = vld [vmem:[%s843 + $0xca] sm:$0xff]
      %v1064 = vld [vmem:[%s843 + $0xda] sm:$0xff]
      %v1065 = vld [vmem:[%s843 + $0xe2] sm:$0xff]
      %v1066 = vld [vmem:[%s843 + $0xf2] sm:$0xff]
      %v1067 = vld [vmem:[%s843 + $0xfa] sm:$0xff]
      %v1068 = vld [vmem:[%s843 + $0x10a] sm:$0xff]
      %v1069 = vld [vmem:[%s843 + $0x112] sm:$0xff]
      %v1070 = vld [vmem:[%s843 + $0x122] sm:$0xff]
      %v1071 = vld [vmem:[%s843 + $0x12a] sm:$0xff]
      %v1072 = vld [vmem:[%s843 + $0x13a] sm:$0xff]
      %v1073 = vld [vmem:[%s843 + $0x142] sm:$0xff]
      %v1074 = vld [vmem:[%s843 + $0x152] sm:$0xff]
      %v1075 = vld [vmem:[%s843 + $0x15a] sm:$0xff]
      %v1076 = vld [vmem:[%s843 + $0x16a] sm:$0xff]
      %v1077 = vld [vmem:[%s843 + $0x172] sm:$0xff]
      %v1078 = vlaneseq
      %v1079 = vshrl.u32 %v1078, 7
      %v1080 = vsub.s32 0, %v1079
      %v1081 = vrot.slane %v1045, %v1080
      %v1082 = vmul.f32 %v1081, %v1046
      %v1083 = vmul.f32 %v1081, %v1047
      %v1084 = vmul.f32 %v1081, %v1048
      %v1085 = vmul.f32 %v1081, %v1049
      %v1086 = vmul.f32 %v1081, %v1050
      %v1087 = vmul.f32 %v1081, %v1051
      %v1088 = vmul.f32 %v1081, %v1052
      %v1089 = vmul.f32 %v1081, %v1053
      %v1090 = vmul.f32 %v1081, %v1054
      %v1091 = vmul.f32 %v1081, %v1055
      %v1092 = vmul.f32 %v1081, %v1056
      %v1093 = vmul.f32 %v1081, %v1057
      %v1094 = vmul.f32 %v1081, %v1058
      %v1095 = vmul.f32 %v1081, %v1059
      %v1096 = vmul.f32 %v1081, %v1060
      %v1097 = vmul.f32 %v1081, %v1061
      %v1098 = vmul.f32 %v1081, %v1062
      %v1099 = vmul.f32 %v1081, %v1063
      %v1100 = vmul.f32 %v1081, %v1064
      %v1101 = vmul.f32 %v1081, %v1065
      %v1102 = vmul.f32 %v1081, %v1066
      %v1103 = vmul.f32 %v1081, %v1067
      %v1104 = vmul.f32 %v1081, %v1068
      %v1105 = vmul.f32 %v1081, %v1069
      %v1106 = vmul.f32 %v1081, %v1070
      %v1107 = vmul.f32 %v1081, %v1071
      %v1108 = vmul.f32 %v1081, %v1072
      %v1109 = vmul.f32 %v1081, %v1073
      %v1110 = vmul.f32 %v1081, %v1074
      %v1111 = vmul.f32 %v1081, %v1075
      %v1112 = vmul.f32 %v1081, %v1076
      %v1113 = vmul.f32 %v1081, %v1077
      %v1114 = vadd.f32 %v1013, %v1082
      %v1115 = vadd.f32 %v1014, %v1083
      %v1116 = vadd.f32 %v1015, %v1084
      %v1117 = vadd.f32 %v1016, %v1085
      %v1118 = vadd.f32 %v1017, %v1086
      %v1119 = vadd.f32 %v1018, %v1087
      %v1120 = vadd.f32 %v1019, %v1088
      %v1121 = vadd.f32 %v1020, %v1089
      %v1122 = vadd.f32 %v1021, %v1090
      %v1123 = vadd.f32 %v1022, %v1091
      %v1124 = vadd.f32 %v1023, %v1092
      %v1125 = vadd.f32 %v1024, %v1093
      %v1126 = vadd.f32 %v1025, %v1094
      %v1127 = vadd.f32 %v1026, %v1095
      %v1128 = vadd.f32 %v1027, %v1096
      %v1129 = vadd.f32 %v1028, %v1097
      %v1130 = vadd.f32 %v1029, %v1098
      %v1131 = vadd.f32 %v1030, %v1099
      %v1132 = vadd.f32 %v1031, %v1100
      %v1133 = vadd.f32 %v1032, %v1101
      %v1134 = vadd.f32 %v1033, %v1102
      %v1135 = vadd.f32 %v1034, %v1103
      %v1136 = vadd.f32 %v1035, %v1104
      %v1137 = vadd.f32 %v1036, %v1105
      %v1138 = vadd.f32 %v1037, %v1106
      %v1139 = vadd.f32 %v1038, %v1107
      %v1140 = vadd.f32 %v1039, %v1108
      %v1141 = vadd.f32 %v1040, %v1109
      %v1142 = vadd.f32 %v1041, %v1110
      %v1143 = vadd.f32 %v1042, %v1111
      %v1144 = vadd.f32 %v1043, %v1112
      %v1145 = vadd.f32 %v1044, %v1113
      %v1146 = vld [vmem:[%s224] sm:$0x1]
      %v1148 = vlaneseq
      %v1149 = vshrl.u32 %v1148, 7
      %v1150 = vsub.s32 0, %v1149
      %v1151 = vrot.slane %v1146, %v1150
      %v1153 = vadd.f32 %v1114, %v1151
      %v1154 = vadd.f32 %v1115, %v1151
      %v1155 = vadd.f32 %v1116, %v1151
      %v1156 = vadd.f32 %v1117, %v1151
      %v1157 = vadd.f32 %v1118, %v1151
      %v1158 = vadd.f32 %v1119, %v1151
      %v1159 = vadd.f32 %v1120, %v1151
      %v1160 = vadd.f32 %v1121, %v1151
      %v1161 = vadd.f32 %v1122, %v1151
      %v1162 = vadd.f32 %v1123, %v1151
      %v1163 = vadd.f32 %v1124, %v1151
      %v1164 = vadd.f32 %v1125, %v1151
      %v1165 = vadd.f32 %v1126, %v1151
      %v1166 = vadd.f32 %v1127, %v1151
      %v1167 = vadd.f32 %v1128, %v1151
      %v1168 = vadd.f32 %v1129, %v1151
      %v1169 = vadd.f32 %v1130, %v1151
      %v1170 = vadd.f32 %v1131, %v1151
      %v1171 = vadd.f32 %v1132, %v1151
      %v1172 = vadd.f32 %v1133, %v1151
      %v1173 = vadd.f32 %v1134, %v1151
      %v1174 = vadd.f32 %v1135, %v1151
      %v1175 = vadd.f32 %v1136, %v1151
      %v1176 = vadd.f32 %v1137, %v1151
      %v1177 = vadd.f32 %v1138, %v1151
      %v1178 = vadd.f32 %v1139, %v1151
      %v1179 = vadd.f32 %v1140, %v1151
      %v1180 = vadd.f32 %v1141, %v1151
      %v1181 = vadd.f32 %v1142, %v1151
      %v1182 = vadd.f32 %v1143, %v1151
      %v1183 = vadd.f32 %v1144, %v1151
      %v1184 = vadd.f32 %v1145, %v1151
      %vm1185 = vcmask 15360
      %1186 = vst.msk [vmem:[%s232] sm:$0xff] %vm1185, %v1153
      %1187 = vst.msk [vmem:[%s232 + $0x8] sm:$0xff] %vm1185, %v1154
      %1188 = vst.msk [vmem:[%s232 + $0x10] sm:$0xff] %vm1185, %v1155
      %1189 = vst.msk [vmem:[%s232 + $0x18] sm:$0xff] %vm1185, %v1156
      %1190 = vst.msk [vmem:[%s232 + $0x20] sm:$0xff] %vm1185, %v1157
      %1191 = vst.msk [vmem:[%s232 + $0x28] sm:$0xff] %vm1185, %v1158
      %1192 = vst.msk [vmem:[%s232 + $0x30] sm:$0xff] %vm1185, %v1159
      %1193 = vst.msk [vmem:[%s232 + $0x38] sm:$0xff] %vm1185, %v1160
      %1194 = vst.msk [vmem:[%s232 + $0x40] sm:$0xff] %vm1185, %v1161
      %1195 = vst.msk [vmem:[%s232 + $0x48] sm:$0xff] %vm1185, %v1162
      %1196 = vst.msk [vmem:[%s232 + $0x50] sm:$0xff] %vm1185, %v1163
      %1197 = vst.msk [vmem:[%s232 + $0x58] sm:$0xff] %vm1185, %v1164
      %1198 = vst.msk [vmem:[%s232 + $0x60] sm:$0xff] %vm1185, %v1165
      %1199 = vst.msk [vmem:[%s232 + $0x68] sm:$0xff] %vm1185, %v1166
      %1200 = vst.msk [vmem:[%s232 + $0x70] sm:$0xff] %vm1185, %v1167
      %1201 = vst.msk [vmem:[%s232 + $0x78] sm:$0xff] %vm1185, %v1168
      %1202 = vst.msk [vmem:[%s232 + $0x80] sm:$0xff] %vm1185, %v1169
      %1203 = vst.msk [vmem:[%s232 + $0x88] sm:$0xff] %vm1185, %v1170
      %1204 = vst.msk [vmem:[%s232 + $0x90] sm:$0xff] %vm1185, %v1171
      %1205 = vst.msk [vmem:[%s232 + $0x98] sm:$0xff] %vm1185, %v1172
      %1206 = vst.msk [vmem:[%s232 + $0xa0] sm:$0xff] %vm1185, %v1173
      %1207 = vst.msk [vmem:[%s232 + $0xa8] sm:$0xff] %vm1185, %v1174
      %1208 = vst.msk [vmem:[%s232 + $0xb0] sm:$0xff] %vm1185, %v1175
      %1209 = vst.msk [vmem:[%s232 + $0xb8] sm:$0xff] %vm1185, %v1176
      %1210 = vst.msk [vmem:[%s232 + $0xc0] sm:$0xff] %vm1185, %v1177
      %1211 = vst.msk [vmem:[%s232 + $0xc8] sm:$0xff] %vm1185, %v1178
      %1212 = vst.msk [vmem:[%s232 + $0xd0] sm:$0xff] %vm1185, %v1179
      %1213 = vst.msk [vmem:[%s232 + $0xd8] sm:$0xff] %vm1185, %v1180
      %1214 = vst.msk [vmem:[%s232 + $0xe0] sm:$0xff] %vm1185, %v1181
      %1215 = vst.msk [vmem:[%s232 + $0xe8] sm:$0xff] %vm1185, %v1182
      %1216 = vst.msk [vmem:[%s232 + $0xf0] sm:$0xff] %vm1185, %v1183
      %1217 = vst.msk [vmem:[%s232 + $0xf8] sm:$0xff] %vm1185, %v1184
      %p1218 = scmp.lt.s32.totalorder %s18, 1
      %s1219 = scalar_select %p1218, %s18, 1
      %p1220 = scmp.lt.s32.totalorder %s19, 0
      %s1221 = scalar_select %p1220, %s19, 0
      %s1222 = smul.addr %s1219, 32
      %s1223 = sadd.s32 %s1221, %s1222
      %s1224 = smul.addr %s1223, 8
      %s1225 = scalar_lea.vmem %s3, %s1224
      // Predicated region
      $region33: #{tpu_custom_call.1} parent=31 // pred_check
        %p1226 = pneg %p126
      $region34: #{tpu_custom_call.1} parent=31 // pred_check_branch
        %1228 = sbr.rel (%p1226) target = $region36
      $region35: #{tpu_custom_call.1} parent=31 // pred_region
        _
      $region36: #{tpu_custom_call.1} parent=31 // pred_fallthru
        _
    $region32: #{tpu_custom_call.1} parent=5 // pred_fallthru
      _
    %p1229 = scmp.le.s32.totalorder 2, %s9
    // Predicated region
    $region37: #{tpu_custom_call.1} parent=5 // pred_check
      %p1230 = pneg %p1229
    $region38: #{tpu_custom_call.1} parent=5 // pred_check_branch
      %1232 = sbr.rel (%p1230) target = $region40
    $region39: #{tpu_custom_call.1} parent=5 // pred_region
      %s1233 = ssub.s32 %s9, 2
      // Predicated region
      $region41: #{tpu_custom_call.1} parent=39 // pred_check
        %p1234 = pneg %p132
      $region42: #{tpu_custom_call.1} parent=39 // pred_check_branch
        %1236 = sbr.rel (%p1234) target = $region44
      $region43: #{tpu_custom_call.1} parent=39 // pred_region
        %p1237 = scmp.lt.s32.totalorder %s20, 1
        %s1238 = scalar_select %p1237, %s20, 1
        %p1239 = scmp.lt.s32.totalorder %s21, 0
        %s1240 = scalar_select %p1239, %s21, 0
        %s1241 = smul.addr %s1238, 32
        %s1242 = sadd.s32 %s1240, %s1241
        %s1243 = smul.addr %s1242, 8
        %s1244 = scalar_lea.vmem %s3, %s1243
      $region44: #{tpu_custom_call.1} parent=39 // pred_fallthru
        _
    $region40: #{tpu_custom_call.1} parent=5 // pred_fallthru
      _
  $region6: #{tpu_custom_call.1} parent=0 // loop_footer
    %s13 = sadd.s32 1, %s9
  $region7: #{tpu_custom_call.1} parent=0 // loop_footer_branch
    %8 = sbr.rel target = $region3
  $region8: #{tpu_custom_call.1} parent=0 // loop_exit
    _

</llo_original>
